<compile_context>
chip_gen: v7x
topology: tpu7x:2x2x1
jax: 0.10.0
libtpu: 0.0.40
codegen_flags: <defaults>
</compile_context>

<pallas_src>
import jax
import jax.numpy as jnp
from jax.experimental import pallas as pl
from jax.experimental.pallas import tpu as pltpu

_MIB = 1 << 20
_VMEM_BUDGET = 28 * _MIB        # working-set cap that fits v5e / v6e / v7x
_W1_RESIDENT_MAX = 8 * _MIB     # hold W1 fully resident in VMEM below this size


def _round_up(x, m):
    return ((x + m - 1) // m) * m


def _two_class_log_softmax_head(h, wdiff_ref, bdiff_ref, o_ref):
    """output Linear(H->2) + log_softmax using only VPU/XLU/EUP (no MXU).

    log_softmax([l0, l1]) = [-softplus(d), -softplus(-d)],
    with d = l1 - l0 = h @ (w2[1]-w2[0]) + (b2[1]-b2[0]).
    """
    d = jnp.sum(h * wdiff_ref[...], axis=-1, keepdims=True) + bdiff_ref[...]
    shared = jnp.log(1.0 + jnp.exp(-jnp.abs(d)))      # stable log(1 + e^{-|d|})
    sp_pos = jnp.maximum(d, 0.0) + shared             # softplus(d)
    sp_neg = jnp.maximum(-d, 0.0) + shared            # softplus(-d)
    o_ref[:, 0:1] = (-sp_pos).astype(o_ref.dtype)
    o_ref[:, 1:2] = (-sp_neg).astype(o_ref.dtype)


def _net_kernel_resident(x_ref, w1_ref, b1_ref, wdiff_ref, bdiff_ref, o_ref):
    # Single full-K dot on the MXU; W1 stays resident in VMEM for the whole grid.
    acc = jnp.dot(x_ref[...], w1_ref[...], preferred_element_type=jnp.float32)
    h = jnp.tanh(acc + b1_ref[...])                   # f32 VPU/EUP math (v5e-safe)
    _two_class_log_softmax_head(h, wdiff_ref, bdiff_ref, o_ref)


def _net_kernel_ktiled(x_ref, w1_ref, b1_ref, wdiff_ref, bdiff_ref, o_ref,
                       acc_ref):
    k = pl.program_id(1)

    @pl.when(k == 0)
    def _init():
        acc_ref[...] = jnp.zeros_like(acc_ref)

    acc_ref[...] += jnp.dot(x_ref[...], w1_ref[...],
                            preferred_element_type=jnp.float32)

    @pl.when(k == pl.num_programs(1) - 1)
    def _finalize():
        h = jnp.tanh(acc_ref[...] + b1_ref[...])
        _two_class_log_softmax_head(h, wdiff_ref, bdiff_ref, o_ref)


def net_forward(x, w1, b1, w2, b2, *, tile_b=512, max_tile_k=512,
                compute_dtype=jnp.bfloat16,
                w1_resident_max_bytes=_W1_RESIDENT_MAX):
    """Forward pass. x:[B,D_in], w1:[D_in,H], b1:[1,H], w2:[2,H], b2:[1,2]."""
    B, D_in = x.shape
    H = w1.shape[1]
    C = w2.shape[0]
    assert w1.shape == (D_in, H)
    assert b1.shape == (1, H)
    assert w2.shape == (C, H) and C == 2
    assert b2.shape == (1, C)

    # Collapse the tiny 2-class head on the host (one-time, a few hundred bytes).
    wdiff = (w2[1:2, :] - w2[0:1, :]).astype(jnp.float32)     # (1, H)
    bdiff = (b2[:, 1:2] - b2[:, 0:1]).astype(jnp.float32)     # (1, 1)
    b1 = b1.astype(jnp.float32)

    if compute_dtype is not None:
        # bf16 streaming halves x/W1 HBM traffic; accumulation stays f32.
        x = x.astype(compute_dtype)
        w1 = w1.astype(compute_dtype)
    xbytes = jnp.dtype(x.dtype).itemsize
    wbytes = jnp.dtype(w1.dtype).itemsize

    # Sub-32-bit dtypes pack rows along sublanes -> align batch tiles to the
    # packed tile (16 rows for bf16, 32 for int8/fp8).
    row_align = 8 * max(1, 4 // xbytes)

    # Batch tiling: no host-side padding.  The grid uses cdiv; edge-block rows
    # past B read unspecified data (rows are independent) and are never written
    # back to the (B, 2) output.
    tile_b = max(row_align, min(int(tile_b), _round_up(B, row_align)))
    tile_b = _round_up(tile_b, row_align)
    # v7x has 2 TensorCores: keep the "parallel" batch axis at >= 2 tiles.
    if pl.cdiv(B, tile_b) < 2 and B >= 2 * row_align:
        tile_b = _round_up(pl.cdiv(B, 2), row_align)

    out_shape = jax.ShapeDtypeStruct((B, C), jnp.float32)
    small_bytes = 256 * 1024  # b1/wdiff/bdiff blocks + slack (generous)

    def resident_need(tb):
        return (2 * tb * D_in * xbytes + 2 * D_in * H * wbytes
                + 2 * tb * C * 4 + small_bytes)

    use_resident = (D_in * H * wbytes <= w1_resident_max_bytes
                    and resident_need(row_align) <= _VMEM_BUDGET)

    if use_resident:
        while tile_b > row_align and resident_need(tile_b) > _VMEM_BUDGET:
            tile_b = _round_up(max(row_align, tile_b // 2), row_align)
        need = resident_need(tile_b)
        grid = (pl.cdiv(B, tile_b),)
        call = pl.pallas_call(
            _net_kernel_resident,
            out_shape=out_shape,
            grid_spec=pltpu.PrefetchScalarGridSpec(
                num_scalar_prefetch=0,
                grid=grid,
                in_specs=[
                    pl.BlockSpec((tile_b, D_in), lambda i: (i, 0)),   # x tile
                    pl.BlockSpec((D_in, H), lambda i: (0, 0)),        # W1 resident
                    pl.BlockSpec((1, H), lambda i: (0, 0)),           # b1
                    pl.BlockSpec((1, H), lambda i: (0, 0)),           # w2[1]-w2[0]
                    pl.BlockSpec((1, 1), lambda i: (0, 0)),           # b2[1]-b2[0]
                ],
                out_specs=pl.BlockSpec((tile_b, C), lambda i: (i, 0)),
            ),
            compiler_params=pltpu.CompilerParams(
                dimension_semantics=("parallel",),
                vmem_limit_bytes=int(min(max(2 * need, 16 * _MIB), 48 * _MIB)),
            ),
        )
        return call(x, w1, b1, wdiff, bdiff)

    # ---- K-tiled fallback for large input_size ------------------------------
    # Zero-pad D_in to a multiple of 128 once (zero rows/cols add nothing to
    # the dot) so tiles stay bounded and (8,128)-aligned.
    d_pad = _round_up(D_in, 128)
    if d_pad != D_in:
        x = jnp.pad(x, ((0, 0), (0, d_pad - D_in)))
        w1 = jnp.pad(w1, ((0, d_pad - D_in), (0, 0)))
    tile_k = 128
    for t in (512, 256, 128):
        if t <= max_tile_k and d_pad % t == 0:
            tile_k = t
            break

    def tiled_need(tb, tk):
        return (2 * tb * tk * xbytes + 2 * tk * H * wbytes
                + tb * H * 4 + 2 * tb * C * 4 + small_bytes)

    while tile_b > row_align and tiled_need(tile_b, tile_k) > _VMEM_BUDGET:
        tile_b = _round_up(max(row_align, tile_b // 2), row_align)
    need = tiled_need(tile_b, tile_k)

    grid = (pl.cdiv(B, tile_b), d_pad // tile_k)
    call = pl.pallas_call(
        _net_kernel_ktiled,
        out_shape=out_shape,
        grid_spec=pltpu.PrefetchScalarGridSpec(
            num_scalar_prefetch=0,
            grid=grid,
            in_specs=[
                pl.BlockSpec((tile_b, tile_k), lambda i, k: (i, k)),  # x tile
                pl.BlockSpec((tile_k, H), lambda i, k: (k, 0)),       # W1 K-tile
                pl.BlockSpec((1, H), lambda i, k: (0, 0)),            # b1
                pl.BlockSpec((1, H), lambda i, k: (0, 0)),            # w2 diff
                pl.BlockSpec((1, 1), lambda i, k: (0, 0)),            # b2 diff
            ],
            out_specs=pl.BlockSpec((tile_b, C), lambda i, k: (i, 0)),
            scratch_shapes=[pltpu.VMEM((tile_b, H), jnp.float32)],
        ),
        compiler_params=pltpu.CompilerParams(
            dimension_semantics=("parallel", "arbitrary"),
            vmem_limit_bytes=int(min(max(2 * need, 16 * _MIB), 48 * _MIB)),
        ),
    )
    return call(x, w1, b1, wdiff, bdiff)


def init_params(key, input_size, hidden_layer_size, num_classes=2):
    # PyTorch nn.Linear-style uniform(-1/sqrt(fan_in), 1/sqrt(fan_in)) init.
    k1, k2, k3, k4 = jax.random.split(key, 4)
    lim1 = 1.0 / jnp.sqrt(jnp.float32(input_size))
    lim2 = 1.0 / jnp.sqrt(jnp.float32(hidden_layer_size))
    w1 = jax.random.uniform(k1, (input_size, hidden_layer_size),
                            jnp.float32, -lim1, lim1)
    b1 = jax.random.uniform(k2, (1, hidden_layer_size),
                            jnp.float32, -lim1, lim1)
    w2 = jax.random.uniform(k3, (num_classes, hidden_layer_size),
                            jnp.float32, -lim2, lim2)
    b2 = jax.random.uniform(k4, (1, num_classes),
                            jnp.float32, -lim2, lim2)
    return w1, b1, w2, b2


def reference_forward(x, w1, b1, w2, b2):
    h = jnp.tanh(x @ w1 + b1)
    logits = h @ w2.T + b2
    return jax.nn.log_softmax(logits, axis=-1)


if __name__ == "__main__":
    key = jax.random.PRNGKey(0)
    kx, kp = jax.random.split(key)

    batch = 300              # ragged on purpose (exercises the clamped edge block)
    input_size = 384
    hidden_layer_size = 64

    x = jax.random.normal(kx, (batch, input_size), jnp.float32)
    w1, b1, w2, b2 = init_params(kp, input_size, hidden_layer_size)

    ref = reference_forward(x, w1, b1, w2, b2)

    # Default config: bf16 streaming, W1 fully resident, single full-K dot.
    out = jax.block_until_ready(net_forward(x, w1, b1, w2, b2))
    assert out.shape == (batch, 2)
    assert jnp.allclose(out, ref, atol=6e-2, rtol=6e-2), "bf16 path mismatch"

    # f32 streaming, forced K-tiled accumulation (exercises the reduction axis
    # and the accumulator init/finalize gating).
    out_f32 = jax.block_until_ready(
        net_forward(x, w1, b1, w2, b2, tile_b=128, max_tile_k=128,
                    compute_dtype=None, w1_resident_max_bytes=0))
    assert out_f32.shape == (batch, 2)
    assert jnp.allclose(out_f32, ref, atol=2e-2, rtol=2e-2), "f32 K-tiled mismatch"

    print("KERNEL_OK")
</pallas_src>

<mosaic_0001>
module attributes {stable_mosaic.version = 11 : i64} {
  func.func @_net_kernel_resident(%arg0: i32, %arg1: memref<160x384xbf16, #tpu.memory_space<vmem>>, %arg2: memref<384x64xbf16, #tpu.memory_space<vmem>>, %arg3: memref<1x64xf32, #tpu.memory_space<vmem>>, %arg4: memref<1x64xf32, #tpu.memory_space<vmem>>, %arg5: memref<1x1xf32, #tpu.memory_space<vmem>>, %arg6: memref<160x2xf32, #tpu.memory_space<vmem>>) attributes {dimension_semantics = [#tpu.dimension_semantics<parallel>], iteration_bounds = array<i64: 2>, scalar_prefetch = 0 : i64, scratch_operands = 0 : i64, tpu.core_type = #tpu.core_type<tc>, window_params = [{transform_indices = @transform_0, window_bounds = array<i64: 160, 384>}, {pipeline_mode = #tpu.pipeline_mode<synchronous>, transform_indices = @transform_1, window_bounds = array<i64: 384, 64>}, {pipeline_mode = #tpu.pipeline_mode<synchronous>, transform_indices = @transform_2, window_bounds = array<i64: 1, 64>}, {pipeline_mode = #tpu.pipeline_mode<synchronous>, transform_indices = @transform_3, window_bounds = array<i64: 1, 64>}, {pipeline_mode = #tpu.pipeline_mode<synchronous>, transform_indices = @transform_4, window_bounds = array<i64: 1, 1>}, {transform_indices = @transform_5, window_bounds = array<i64: 160, 2>}]} {
    %c0 = arith.constant 0 : index
    %c0_0 = arith.constant 0 : index
    %0 = vector.load %arg1[%c0, %c0_0] : memref<160x384xbf16, #tpu.memory_space<vmem>>, vector<160x384xbf16>
    %c0_1 = arith.constant 0 : index
    %c0_2 = arith.constant 0 : index
    %1 = vector.load %arg2[%c0_1, %c0_2] : memref<384x64xbf16, #tpu.memory_space<vmem>>, vector<384x64xbf16>
    %cst = arith.constant dense<0.000000e+00> : vector<160x64xf32>
    %2 = tpu.matmul %0, %1, %cst {dimension_numbers = #tpu.dot_dimension_numbers<[1], [0], [0], [1], [0, 0, 1, 1], [], []>} : vector<160x384xbf16>, vector<384x64xbf16>, vector<160x64xf32> -> vector<160x64xf32>
    %c0_3 = arith.constant 0 : index
    %c0_4 = arith.constant 0 : index
    %3 = vector.load %arg3[%c0_3, %c0_4] : memref<1x64xf32, #tpu.memory_space<vmem>>, vector<1x64xf32>
    %4 = vector.broadcast %3 : vector<1x64xf32> to vector<160x64xf32>
    %5 = arith.addf %2, %4 : vector<160x64xf32>
    %6 = math.tanh %5 : vector<160x64xf32>
    %c0_5 = arith.constant 0 : index
    %c0_6 = arith.constant 0 : index
    %7 = vector.load %arg4[%c0_5, %c0_6] : memref<1x64xf32, #tpu.memory_space<vmem>>, vector<1x64xf32>
    %8 = vector.broadcast %7 : vector<1x64xf32> to vector<160x64xf32>
    %9 = arith.mulf %6, %8 : vector<160x64xf32>
    %cst_7 = arith.constant dense<0.000000e+00> : vector<160xf32>
    %10 = vector.multi_reduction <add>, %9, %cst_7 [1] : vector<160x64xf32> to vector<160xf32>
    %11 = vector.shape_cast %10 : vector<160xf32> to vector<160x1xf32>
    %c0_8 = arith.constant 0 : index
    %c0_9 = arith.constant 0 : index
    %12 = vector.load %arg5[%c0_8, %c0_9] : memref<1x1xf32, #tpu.memory_space<vmem>>, vector<1x1xf32>
    %13 = vector.broadcast %12 : vector<1x1xf32> to vector<160x1xf32>
    %14 = arith.addf %11, %13 : vector<160x1xf32>
    %15 = math.absf %14 : vector<160x1xf32>
    %cst_10 = arith.constant 0.000000e+00 : f32
    %16 = vector.broadcast %cst_10 : f32 to vector<160x1xf32>
    %17 = arith.subf %16, %15 : vector<160x1xf32>
    %18 = math.exp %17 : vector<160x1xf32>
    %cst_11 = arith.constant 1.000000e+00 : f32
    %19 = vector.broadcast %cst_11 : f32 to vector<160x1xf32>
    %20 = arith.addf %19, %18 : vector<160x1xf32>
    %21 = math.log %20 : vector<160x1xf32>
    %cst_12 = arith.constant 0.000000e+00 : f32
    %22 = vector.broadcast %cst_12 : f32 to vector<160x1xf32>
    %23 = arith.maximumf %14, %22 : vector<160x1xf32>
    %24 = arith.addf %23, %21 : vector<160x1xf32>
    %cst_13 = arith.constant 0.000000e+00 : f32
    %25 = vector.broadcast %cst_13 : f32 to vector<160x1xf32>
    %26 = arith.subf %25, %14 : vector<160x1xf32>
    %cst_14 = arith.constant 0.000000e+00 : f32
    %27 = vector.broadcast %cst_14 : f32 to vector<160x1xf32>
    %28 = arith.maximumf %26, %27 : vector<160x1xf32>
    %29 = arith.addf %28, %21 : vector<160x1xf32>
    %cst_15 = arith.constant 0.000000e+00 : f32
    %30 = vector.broadcast %cst_15 : f32 to vector<160x1xf32>
    %31 = arith.subf %30, %24 : vector<160x1xf32>
    %c0_16 = arith.constant 0 : index
    %c0_17 = arith.constant 0 : index
    %32 = vector.load %arg6[%c0_16, %c0_17] : memref<160x2xf32, #tpu.memory_space<vmem>>, vector<160x1xf32>
    tpu.vector_store %arg6[%c0_16, %c0_17], %31 {strides = array<i32>} : memref<160x2xf32, #tpu.memory_space<vmem>>, vector<160x1xf32>,
    %cst_18 = arith.constant 0.000000e+00 : f32
    %33 = vector.broadcast %cst_18 : f32 to vector<160x1xf32>
    %34 = arith.subf %33, %29 : vector<160x1xf32>
    %c0_19 = arith.constant 0 : index
    %c1 = arith.constant 1 : index
    %35 = vector.load %arg6[%c0_19, %c1] : memref<160x2xf32, #tpu.memory_space<vmem>>, vector<160x1xf32>
    tpu.vector_store %arg6[%c0_19, %c1], %34 {strides = array<i32>} : memref<160x2xf32, #tpu.memory_space<vmem>>, vector<160x1xf32>,
    return
  }
  func.func @transform_0(%arg0: i32) -> (i32, i32) {
    %c0_i32 = arith.constant 0 : i32
    %c0_i32_0 = arith.constant 0 : i32
    return %arg0, %c0_i32 : i32, i32
  }
  func.func @transform_1(%arg0: i32) -> (i32, i32) {
    %c0_i32 = arith.constant 0 : i32
    %c0_i32_0 = arith.constant 0 : i32
    %c0_i32_1 = arith.constant 0 : i32
    return %c0_i32, %c0_i32_0 : i32, i32
  }
  func.func @transform_2(%arg0: i32) -> (i32, i32) {
    %c0_i32 = arith.constant 0 : i32
    %c0_i32_0 = arith.constant 0 : i32
    %c0_i32_1 = arith.constant 0 : i32
    return %c0_i32, %c0_i32_0 : i32, i32
  }
  func.func @transform_3(%arg0: i32) -> (i32, i32) {
    %c0_i32 = arith.constant 0 : i32
    %c0_i32_0 = arith.constant 0 : i32
    %c0_i32_1 = arith.constant 0 : i32
    return %c0_i32, %c0_i32_0 : i32, i32
  }
  func.func @transform_4(%arg0: i32) -> (i32, i32) {
    %c0_i32 = arith.constant 0 : i32
    %c0_i32_0 = arith.constant 0 : i32
    %c0_i32_1 = arith.constant 0 : i32
    return %c0_i32, %c0_i32_0 : i32, i32
  }
  func.func @transform_5(%arg0: i32) -> (i32, i32) {
    %c0_i32 = arith.constant 0 : i32
    %c0_i32_0 = arith.constant 0 : i32
    return %arg0, %c0_i32 : i32, i32
  }
}

</mosaic_0001>

<llo_original>
// kernel: tpu_custom_call.1
$region0: #{tpu_custom_call.1}
  #allocation0 [shape = 'u32[]', space=smem, size = 0x4, offset = 0x4, fixed_abs, tag = 'smem constant byte address 0x4 - core index']
  #allocation1 [shape = 'u32[144,128]{1,0:T(1,128)}', space=vmem, size = 0x12000, scoped, tag = 'internal scratch']
  #allocation2 [shape = 'f32[1,1]{1,0:T(1,128)S(1)}', space=vmem, size = 0x200, scoped, tag = 'scoped memory for tpu_custom_call.1']
  %s0 = inlined_call_operand.hbm [shape: bf16[300,384], index: 0, kind: input, shape index: {}]
  %s1 = inlined_call_operand.vmem [shape: bf16[384,64], index: 1, kind: input, shape index: {}]
  %s2 = inlined_call_operand.vmem [shape: f32[1,64], index: 2, kind: input, shape index: {}]
  %s3 = inlined_call_operand.vmem [shape: f32[1,64], index: 3, kind: input, shape index: {}]
  %s4 = inlined_call_operand.<no memory space> [shape: f32[1,1], index: 4, kind: input, shape index: {}]
  %s5 = inlined_call_operand.vmem [shape: f32[300,2], index: 5, kind: output, shape index: {}]
  %s6 = sld [smem:[#allocation0]]
  $region105: #{tpu_custom_call.1} parent=0
    _
  %s8 = ssub.s32 1, %s6
  %s9 = scalar_select 0, %s8, %s6
  %v10 = vstv %s4
  %11 = vst [vmem:[#allocation2] sm:$0x1] %v10
  $region1: #{tpu_custom_call.1} parent=0
    #allocation3 [shape = 'u8[245760]{0}', space=vmem, size = 0x3c000, scoped, tag = 'input window, operand 0']
    #allocation4 [shape = 's32[2]{0}', space=sflag, size = 0x8, scoped, tag = 'scoped memory for tpu_custom_call.1']
    #allocation5 [shape = 'u8[163840]{0}', space=vmem, size = 0x28000, scoped, tag = 'output window, operand 0']
    %12 = vsyncpa [#allocation4], 0
    %s13 = scalar_lea.sflag [#allocation4], 1
    %14 = vsyncpa %s13, 0
    loop: start=0, step=1, limit=4
    $region2: #{tpu_custom_call.1} parent=1 // loop_pre_header
      _
    $region3: #{tpu_custom_call.1} parent=1 // loop_header
      %s16 = sphi 0, %s20
      %p17 = scmp.ge.s32.totalorder %s16, 4
      %s26 = sphi 0, %s28
      %s29 = sphi 0, %s26
      %s30 = sphi 0, %s29
      %s46 = sphi 0, %s30
      %s50 = sphi 0, %s50
      %s52 = sphi 0, %s50
      %s53 = sphi 0, %s52
      %s67 = sphi 0, %s53
      %s71 = sphi 0, %s71
      %s73 = sphi 0, %s71
      %s74 = sphi 0, %s73
      %s88 = sphi 0, %s74
      %s92 = sphi 0, %s92
      %s94 = sphi 0, %s92
      %s95 = sphi 0, %s94
      %s109 = sphi 0, %s95
      %s113 = sphi 0, %s113
      %s115 = sphi 0, %s113
      %s116 = sphi 0, %s115
      %s130 = sphi 0, %s116
      %s136 = sphi 0, %s138
      %s139 = sphi 0, %s136
      %s140 = sphi 0, %s139
      %s156 = sphi 0, %s140
    $region4: #{tpu_custom_call.1} parent=1 // loop_header_branch
      %19 = sbr.rel (%p17) target = $region8
    $region5: #{tpu_custom_call.1} parent=1 // loop_body
      %s21 = ssub.s32 %s16, 1
      %s22 = ssub.s32 %s16, 2
      %s23 = sadd.s32 %s16, 1
      %s24 = ssub.s32 %s16, %s23
      %p25 = scmp.eq.s32.totalorder %s24, 0
      %s27 = sadd.s32 %s26, 1
      %s28 = scalar_select %p25, %s26, %s27
      %p31 = pneg %p25
      %p32 = scmp.eq.s32.totalorder %s16, 1
      %p33 = por %p31, %p32
      %p34 = scmp.ne.s32.totalorder %s26, %s29
      %p35 = scmp.eq.s32.totalorder %s16, 0
      %p36 = por %p34, %p35
      %p37 = scmp.ne.s32.totalorder %s26, %s29
      %p38 = scmp.eq.s32.totalorder %s21, 1
      %p39 = por %p37, %p38
      %p40 = scmp.ne.s32.totalorder %s29, %s30
      %p41 = scmp.eq.s32.totalorder %s21, 0
      %p42 = por %p40, %p41
      %p43 = scmp.ne.s32.totalorder %s29, %s30
      %p44 = scmp.eq.s32.totalorder %s22, 1
      %p45 = por %p43, %p44
      %p47 = scmp.ne.s32.totalorder %s30, %s46
      %p48 = scmp.eq.s32.totalorder %s22, 0
      %p49 = por %p47, %p48
      %s51 = sadd.s32 %s50, 1
      %p54 = scmp.eq.s32.totalorder %s16, 1
      %p55 = scmp.ne.s32.totalorder %s50, %s52
      %p56 = scmp.eq.s32.totalorder %s16, 0
      %p57 = por %p55, %p56
      %p58 = scmp.ne.s32.totalorder %s50, %s52
      %p59 = scmp.eq.s32.totalorder %s21, 1
      %p60 = por %p58, %p59
      %p61 = scmp.ne.s32.totalorder %s52, %s53
      %p62 = scmp.eq.s32.totalorder %s21, 0
      %p63 = por %p61, %p62
      %p64 = scmp.ne.s32.totalorder %s52, %s53
      %p65 = scmp.eq.s32.totalorder %s22, 1
      %p66 = por %p64, %p65
      %p68 = scmp.ne.s32.totalorder %s53, %s67
      %p69 = scmp.eq.s32.totalorder %s22, 0
      %p70 = por %p68, %p69
      %s72 = sadd.s32 %s71, 1
      %p75 = scmp.eq.s32.totalorder %s16, 1
      %p76 = scmp.ne.s32.totalorder %s71, %s73
      %p77 = scmp.eq.s32.totalorder %s16, 0
      %p78 = por %p76, %p77
      %p79 = scmp.ne.s32.totalorder %s71, %s73
      %p80 = scmp.eq.s32.totalorder %s21, 1
      %p81 = por %p79, %p80
      %p82 = scmp.ne.s32.totalorder %s73, %s74
      %p83 = scmp.eq.s32.totalorder %s21, 0
      %p84 = por %p82, %p83
      %p85 = scmp.ne.s32.totalorder %s73, %s74
      %p86 = scmp.eq.s32.totalorder %s22, 1
      %p87 = por %p85, %p86
      %p89 = scmp.ne.s32.totalorder %s74, %s88
      %p90 = scmp.eq.s32.totalorder %s22, 0
      %p91 = por %p89, %p90
      %s93 = sadd.s32 %s92, 1
      %p96 = scmp.eq.s32.totalorder %s16, 1
      %p97 = scmp.ne.s32.totalorder %s92, %s94
      %p98 = scmp.eq.s32.totalorder %s16, 0
      %p99 = por %p97, %p98
      %p100 = scmp.ne.s32.totalorder %s92, %s94
      %p101 = scmp.eq.s32.totalorder %s21, 1
      %p102 = por %p100, %p101
      %p103 = scmp.ne.s32.totalorder %s94, %s95
      %p104 = scmp.eq.s32.totalorder %s21, 0
      %p105 = por %p103, %p104
      %p106 = scmp.ne.s32.totalorder %s94, %s95
      %p107 = scmp.eq.s32.totalorder %s22, 1
      %p108 = por %p106, %p107
      %p110 = scmp.ne.s32.totalorder %s95, %s109
      %p111 = scmp.eq.s32.totalorder %s22, 0
      %p112 = por %p110, %p111
      %s114 = sadd.s32 %s113, 1
      %p117 = scmp.eq.s32.totalorder %s16, 1
      %p118 = scmp.ne.s32.totalorder %s113, %s115
      %p119 = scmp.eq.s32.totalorder %s16, 0
      %p120 = por %p118, %p119
      %p121 = scmp.ne.s32.totalorder %s113, %s115
      %p122 = scmp.eq.s32.totalorder %s21, 1
      %p123 = por %p121, %p122
      %p124 = scmp.ne.s32.totalorder %s115, %s116
      %p125 = scmp.eq.s32.totalorder %s21, 0
      %p126 = por %p124, %p125
      %p127 = scmp.ne.s32.totalorder %s115, %s116
      %p128 = scmp.eq.s32.totalorder %s22, 1
      %p129 = por %p127, %p128
      %p131 = scmp.ne.s32.totalorder %s116, %s130
      %p132 = scmp.eq.s32.totalorder %s22, 0
      %p133 = por %p131, %p132
      %s134 = ssub.s32 %s16, %s23
      %p135 = scmp.eq.s32.totalorder %s134, 0
      %s137 = sadd.s32 %s136, 1
      %s138 = scalar_select %p135, %s136, %s137
      %p141 = pneg %p135
      %p142 = scmp.eq.s32.totalorder %s16, 1
      %p143 = por %p141, %p142
      %p144 = scmp.ne.s32.totalorder %s136, %s139
      %p145 = scmp.eq.s32.totalorder %s16, 0
      %p146 = por %p144, %p145
      %p147 = scmp.ne.s32.totalorder %s136, %s139
      %p148 = scmp.eq.s32.totalorder %s21, 1
      %p149 = por %p147, %p148
      %p150 = scmp.ne.s32.totalorder %s139, %s140
      %p151 = scmp.eq.s32.totalorder %s21, 0
      %p152 = por %p150, %p151
      %p153 = scmp.ne.s32.totalorder %s139, %s140
      %p154 = scmp.eq.s32.totalorder %s22, 1
      %p155 = por %p153, %p154
      %p157 = scmp.ne.s32.totalorder %s140, %s156
      %p158 = scmp.eq.s32.totalorder %s22, 0
      %p159 = por %p157, %p158
      %p160 = scmp.le.s32.totalorder 1, %s16
      %p161 = scmp.lt.s32.totalorder %s16, 3
      %p162 = pnand %p160, %p161
      %p163 = pneg %p162
      // Predicated region
      $region9: #{tpu_custom_call.1} parent=5 // pred_check
        _
      $region10: #{tpu_custom_call.1} parent=5 // pred_check_branch
        %165 = sbr.rel (%p162) target = $region12
      $region11: #{tpu_custom_call.1} parent=5 // pred_region
        %s166 = ssub.s32 %s16, 1
        // Predicated region
        $region13: #{tpu_custom_call.1} parent=11 // pred_check
          %p167 = pneg %p63
        $region14: #{tpu_custom_call.1} parent=11 // pred_check_branch
          %169 = sbr.rel (%p167) target = $region16
        $region15: #{tpu_custom_call.1} parent=11 // pred_region
          _
        $region16: #{tpu_custom_call.1} parent=11 // pred_fallthru
          _
        // Predicated region
        $region17: #{tpu_custom_call.1} parent=11 // pred_check
          %p170 = pneg %p84
        $region18: #{tpu_custom_call.1} parent=11 // pred_check_branch
          %172 = sbr.rel (%p170) target = $region20
        $region19: #{tpu_custom_call.1} parent=11 // pred_region
          _
        $region20: #{tpu_custom_call.1} parent=11 // pred_fallthru
          _
        // Predicated region
        $region21: #{tpu_custom_call.1} parent=11 // pred_check
          %p173 = pneg %p105
        $region22: #{tpu_custom_call.1} parent=11 // pred_check_branch
          %175 = sbr.rel (%p173) target = $region24
        $region23: #{tpu_custom_call.1} parent=11 // pred_region
          _
        $region24: #{tpu_custom_call.1} parent=11 // pred_fallthru
          _
        // Predicated region
        $region25: #{tpu_custom_call.1} parent=11 // pred_check
          %p176 = pneg %p126
        $region26: #{tpu_custom_call.1} parent=11 // pred_check_branch
          %178 = sbr.rel (%p176) target = $region28
        $region27: #{tpu_custom_call.1} parent=11 // pred_region
          _
        $region28: #{tpu_custom_call.1} parent=11 // pred_fallthru
          _
      $region12: #{tpu_custom_call.1} parent=5 // pred_fallthru
        _
      %p179 = scmp.lt.s32.totalorder %s16, 2
      // Predicated region
      $region29: #{tpu_custom_call.1} parent=5 // pred_check
        %p180 = pneg %p179
      $region30: #{tpu_custom_call.1} parent=5 // pred_check_branch
        %182 = sbr.rel (%p180) target = $region32
      $region31: #{tpu_custom_call.1} parent=5 // pred_region
        // Predicated region
        $region33: #{tpu_custom_call.1} parent=31 // pred_check
          %p183 = pneg %p36
        $region34: #{tpu_custom_call.1} parent=31 // pred_check_branch
          %185 = sbr.rel (%p183) target = $region36
        $region35: #{tpu_custom_call.1} parent=31 // pred_region
          %s186 = sand.u32 %s26, 1
          %s187 = scalar_lea.sflag [#allocation4], %s186
          %s188 = sand.u32 %s26, 1
          %s189 = smul.addr %s188, 240
          %s190 = scalar_lea.vmem [#allocation3], %s189
          %s191 = smul.u32 20, %s16
          %s192 = ssub.s32 38, %s191
          %p193 = scmp.lt.s32.totalorder %s192, 20
          %s194 = scalar_select %p193, %s192, 20
          %s195 = smul.u32 64, %s194
          %s196 = smul.u32 %s195, 3
          %s198 = ssub.s32 3840, %s196
          %199 = vsyncadd %s187, %s198
          %p200 = scmp.ne.s32.totalorder 0, %s196
          %s201 = smul.addr %s191, 3
          %s202 = smul.addr %s201, 64
          %s203 = scalar_lea.hbm %s0, %s202
          %s204 = smul.u32 12, %s194
          %s205 = sshll.u32 %s190, 4
          %s206 = int_to_ptr.vmem [resolvable:$true] %s205
          %s207 = sshll.u32 %s204, 4
          %211 = dma.hbm_to_vmem [thread:$0]  (%p200), %s203, %s207, %s206, %s187, 192, 192, 12
        $region36: #{tpu_custom_call.1} parent=31 // pred_fallthru
          _
      $region32: #{tpu_custom_call.1} parent=5 // pred_fallthru
        _
      %p212 = scmp.le.s32.totalorder 1, %s16
      %p213 = scmp.lt.s32.totalorder %s16, 3
      %p214 = pnand %p212, %p213
      %p215 = pneg %p214
      // Predicated region
      $region37: #{tpu_custom_call.1} parent=5 // pred_check
        _
      $region38: #{tpu_custom_call.1} parent=5 // pred_check_branch
        %217 = sbr.rel (%p214) target = $region40
      $region39: #{tpu_custom_call.1} parent=5 // pred_region
        %s218 = ssub.s32 %s16, 1
        %s219 = sand.u32 %s29, 1
        %s220 = scalar_lea.sflag [#allocation4], %s219
        %s221 = sand.u32 %s29, 1
        %s222 = smul.addr %s221, 240
        %s223 = scalar_lea.vmem [#allocation3], %s222
        // Predicated region
        $region41: #{tpu_custom_call.1} parent=39 // pred_check
          %p224 = pneg %p42
        $region42: #{tpu_custom_call.1} parent=39 // pred_check_branch
          %226 = sbr.rel (%p224) target = $region44
        $region43: #{tpu_custom_call.1} parent=39 // pred_region
          %227 = dma.done %s220, 3840
        $region44: #{tpu_custom_call.1} parent=39 // pred_fallthru
          _
        %s228 = sand.u32 %s29, 1
        %s229 = scalar_lea.sflag [#allocation4], %s228
        %s230 = sand.u32 %s29, 1
        %s231 = smul.addr %s230, 240
        %s232 = scalar_lea.vmem [#allocation3], %s231
        %p233 = pneg %p42
        %p234 = pneg %p39
        %p235 = pneg %p63
        %p236 = pneg %p60
        %p237 = pneg %p84
        %p238 = pneg %p81
        %p239 = pneg %p105
        %p240 = pneg %p102
        %p241 = pneg %p126
        %p242 = pneg %p123
        %p243 = pneg %p152
        %p244 = pneg %p149
        %s245 = sand.u32 %s139, 1
        %s246 = sand.u32 %s139, 1
        %s247 = smul.addr %s246, 160
        %s248 = scalar_lea.vmem [#allocation5], %s247
        %s249 = smul.u32 20, %s21
        %s250 = ssub.s32 38, %s249
        %p251 = scmp.lt.s32.totalorder %s250, 20
        %s252 = scalar_select %p251, %s250, 20
        %s253 = smul.u32 64, %s252
        %s254 = smul.u32 %s253, 3
        %s255 = smul.u32 20, %s21
        %s256 = ssub.s32 38, %s255
        %p257 = scmp.lt.s32.totalorder %s256, 20
        %s258 = scalar_select %p257, %s256, 20
        %s259 = smul.u32 128, %s258
        %v261 = vld [vmem:[%s223] sm:$0xff]
        %v262 = vld [vmem:[%s223 + $0x8] sm:$0xf]
        %v263 = vld [vmem:[%s223 + $0xc] sm:$0xff]
        %v264 = vld [vmem:[%s223 + $0x14] sm:$0xf]
        %v265 = vld [vmem:[%s223 + $0x18] sm:$0xff]
        %v266 = vld [vmem:[%s223 + $0x20] sm:$0xf]
        %v267 = vld [vmem:[%s223 + $0x24] sm:$0xff]
        %v268 = vld [vmem:[%s223 + $0x2c] sm:$0xf]
        %v269 = vld [vmem:[%s223 + $0x30] sm:$0xff]
        %v270 = vld [vmem:[%s223 + $0x38] sm:$0xf]
        %v271 = vld [vmem:[%s223 + $0x3c] sm:$0xff]
        %v272 = vld [vmem:[%s223 + $0x44] sm:$0xf]
        %v273 = vld [vmem:[%s223 + $0x48] sm:$0xff]
        %v274 = vld [vmem:[%s223 + $0x50] sm:$0xf]
        %v275 = vld [vmem:[%s223 + $0x54] sm:$0xff]
        %v276 = vld [vmem:[%s223 + $0x5c] sm:$0xf]
        %v277 = vld [vmem:[%s223 + $0x60] sm:$0xff]
        %v278 = vld [vmem:[%s223 + $0x68] sm:$0xf]
        %v279 = vld [vmem:[%s223 + $0x6c] sm:$0xff]
        %v280 = vld [vmem:[%s223 + $0x74] sm:$0xf]
        %v281 = vld [vmem:[%s223 + $0x78] sm:$0xff]
        %v282 = vld [vmem:[%s223 + $0x80] sm:$0xf]
        %v283 = vld [vmem:[%s223 + $0x84] sm:$0xff]
        %v284 = vld [vmem:[%s223 + $0x8c] sm:$0xf]
        %v285 = vld [vmem:[%s223 + $0x90] sm:$0xff]
        %v286 = vld [vmem:[%s223 + $0x98] sm:$0xf]
        %v287 = vld [vmem:[%s223 + $0x9c] sm:$0xff]
        %v288 = vld [vmem:[%s223 + $0xa4] sm:$0xf]
        %v289 = vld [vmem:[%s223 + $0xa8] sm:$0xff]
        %v290 = vld [vmem:[%s223 + $0xb0] sm:$0xf]
        %v291 = vld [vmem:[%s223 + $0xb4] sm:$0xff]
        %v292 = vld [vmem:[%s223 + $0xbc] sm:$0xf]
        %v293 = vld [vmem:[%s223 + $0xc0] sm:$0xff]
        %v294 = vld [vmem:[%s223 + $0xc8] sm:$0xf]
        %v295 = vld [vmem:[%s223 + $0xcc] sm:$0xff]
        %v296 = vld [vmem:[%s223 + $0xd4] sm:$0xf]
        %v297 = vld [vmem:[%s223 + $0xd8] sm:$0xff]
        %v298 = vld [vmem:[%s223 + $0xe0] sm:$0xf]
        %v299 = vld [vmem:[%s223 + $0xe4] sm:$0xff]
        %v300 = vld [vmem:[%s223 + $0xec] sm:$0xf]
        %v301 = vld [vmem:[%s1] sm:$0xf]
        %v302 = vld [vmem:[%s1 + $0x4] sm:$0xf]
        %v303 = vld [vmem:[%s1 + $0x8] sm:$0xf]
        %v304 = vld [vmem:[%s1 + $0xc] sm:$0xf]
        %v305 = vld [vmem:[%s1 + $0x10] sm:$0xf]
        %v306 = vld [vmem:[%s1 + $0x14] sm:$0xf]
        %v307 = vld [vmem:[%s1 + $0x18] sm:$0xf]
        %v308 = vld [vmem:[%s1 + $0x1c] sm:$0xf]
        %v309 = vld [vmem:[%s1 + $0x20] sm:$0xf]
        %v310 = vld [vmem:[%s1 + $0x24] sm:$0xf]
        %v311 = vld [vmem:[%s1 + $0x28] sm:$0xf]
        %v312 = vld [vmem:[%s1 + $0x2c] sm:$0xf]
        %v313 = vld [vmem:[%s1 + $0x30] sm:$0xf]
        %v314 = vld [vmem:[%s1 + $0x34] sm:$0xf]
        %v315 = vld [vmem:[%s1 + $0x38] sm:$0xf]
        %v316 = vld [vmem:[%s1 + $0x3c] sm:$0xf]
        %v317 = vld [vmem:[%s1 + $0x40] sm:$0xf]
        %v318 = vld [vmem:[%s1 + $0x44] sm:$0xf]
        %v319 = vld [vmem:[%s1 + $0x48] sm:$0xf]
        %v320 = vld [vmem:[%s1 + $0x4c] sm:$0xf]
        %v321 = vld [vmem:[%s1 + $0x50] sm:$0xf]
        %v322 = vld [vmem:[%s1 + $0x54] sm:$0xf]
        %v323 = vld [vmem:[%s1 + $0x58] sm:$0xf]
        %v324 = vld [vmem:[%s1 + $0x5c] sm:$0xf]
        %v325 = vld [vmem:[%s1 + $0x60] sm:$0xf]
        %v326 = vld [vmem:[%s1 + $0x64] sm:$0xf]
        %v327 = vld [vmem:[%s1 + $0x68] sm:$0xf]
        %v328 = vld [vmem:[%s1 + $0x6c] sm:$0xf]
        %v329 = vld [vmem:[%s1 + $0x70] sm:$0xf]
        %v330 = vld [vmem:[%s1 + $0x74] sm:$0xf]
        %v331 = vld [vmem:[%s1 + $0x78] sm:$0xf]
        %v332 = vld [vmem:[%s1 + $0x7c] sm:$0xf]
        %v333 = vld [vmem:[%s1 + $0x80] sm:$0xf]
        %v334 = vld [vmem:[%s1 + $0x84] sm:$0xf]
        %v335 = vld [vmem:[%s1 + $0x88] sm:$0xf]
        %v336 = vld [vmem:[%s1 + $0x8c] sm:$0xf]
        %v337 = vld [vmem:[%s1 + $0x90] sm:$0xf]
        %v338 = vld [vmem:[%s1 + $0x94] sm:$0xf]
        %v339 = vld [vmem:[%s1 + $0x98] sm:$0xf]
        %v340 = vld [vmem:[%s1 + $0x9c] sm:$0xf]
        %v341 = vld [vmem:[%s1 + $0xa0] sm:$0xf]
        %v342 = vld [vmem:[%s1 + $0xa4] sm:$0xf]
        %v343 = vld [vmem:[%s1 + $0xa8] sm:$0xf]
        %v344 = vld [vmem:[%s1 + $0xac] sm:$0xf]
        %v345 = vld [vmem:[%s1 + $0xb0] sm:$0xf]
        %v346 = vld [vmem:[%s1 + $0xb4] sm:$0xf]
        %v347 = vld [vmem:[%s1 + $0xb8] sm:$0xf]
        %v348 = vld [vmem:[%s1 + $0xbc] sm:$0xf]
        %v349 = vld [vmem:[%s2] sm:$0x1]
        %v351 = vlaneseq
        %v352 = vshrl.u32 %v351, 7
        %v353 = vsub.s32 0, %v352
        %v354 = vrot.slane %v349, %v353
        %v396 = vunpack.c.l.b16 %v261
        %v397 = vunpack.c.h.b16 %v261
        %v398 = vunpack.c.l.b16 %v262
        %v399 = vunpack.c.l.b16 %v263
        %v400 = vunpack.c.h.b16 %v263
        %v401 = vunpack.c.l.b16 %v264
        %v402 = vunpack.c.l.b16 %v265
        %v403 = vunpack.c.h.b16 %v265
        %v404 = vunpack.c.l.b16 %v266
        %v405 = vunpack.c.l.b16 %v267
        %v406 = vunpack.c.h.b16 %v267
        %v407 = vunpack.c.l.b16 %v268
        %v408 = vunpack.c.l.b16 %v269
        %v409 = vunpack.c.h.b16 %v269
        %v410 = vunpack.c.l.b16 %v270
        %v411 = vunpack.c.l.b16 %v271
        %v412 = vunpack.c.h.b16 %v271
        %v413 = vunpack.c.l.b16 %v272
        %v414 = vunpack.c.l.b16 %v273
        %v415 = vunpack.c.h.b16 %v273
        %v416 = vunpack.c.l.b16 %v274
        %v417 = vunpack.c.l.b16 %v275
        %v418 = vunpack.c.h.b16 %v275
        %v419 = vunpack.c.l.b16 %v276
        %v420 = vunpack.c.l.b16 %v277
        %v421 = vunpack.c.h.b16 %v277
        %v422 = vunpack.c.l.b16 %v278
        %v423 = vunpack.c.l.b16 %v279
        %v424 = vunpack.c.h.b16 %v279
        %v425 = vunpack.c.l.b16 %v280
        %v426 = vunpack.c.l.b16 %v281
        %v427 = vunpack.c.h.b16 %v281
        %v428 = vunpack.c.l.b16 %v282
        %v429 = vunpack.c.l.b16 %v283
        %v430 = vunpack.c.h.b16 %v283
        %v431 = vunpack.c.l.b16 %v284
        %v432 = vunpack.c.l.b16 %v285
        %v433 = vunpack.c.h.b16 %v285
        %v434 = vunpack.c.l.b16 %v286
        %v435 = vunpack.c.l.b16 %v287
        %v436 = vunpack.c.h.b16 %v287
        %v437 = vunpack.c.l.b16 %v288
        %v438 = vunpack.c.l.b16 %v289
        %v439 = vunpack.c.h.b16 %v289
        %v440 = vunpack.c.l.b16 %v290
        %v441 = vunpack.c.l.b16 %v291
        %v442 = vunpack.c.h.b16 %v291
        %v443 = vunpack.c.l.b16 %v292
        %v444 = vunpack.c.l.b16 %v293
        %v445 = vunpack.c.h.b16 %v293
        %v446 = vunpack.c.l.b16 %v294
        %v447 = vunpack.c.l.b16 %v295
        %v448 = vunpack.c.h.b16 %v295
        %v449 = vunpack.c.l.b16 %v296
        %v450 = vunpack.c.l.b16 %v297
        %v451 = vunpack.c.h.b16 %v297
        %v452 = vunpack.c.l.b16 %v298
        %v453 = vunpack.c.l.b16 %v299
        %v454 = vunpack.c.h.b16 %v299
        %v455 = vunpack.c.l.b16 %v300
        %v456 = vpack.c.b16 %v399, %v396
        %v457 = vpack.c.b16 %v400, %v397
        %v458 = vpack.c.b16 %v401, %v398
        %v459 = vpack.c.b16 %v405, %v402
        %v460 = vpack.c.b16 %v406, %v403
        %v461 = vpack.c.b16 %v407, %v404
        %v462 = vpack.c.b16 %v411, %v408
        %v463 = vpack.c.b16 %v412, %v409
        %v464 = vpack.c.b16 %v413, %v410
        %v465 = vpack.c.b16 %v417, %v414
        %v466 = vpack.c.b16 %v418, %v415
        %v467 = vpack.c.b16 %v419, %v416
        %v468 = vpack.c.b16 %v423, %v420
        %v469 = vpack.c.b16 %v424, %v421
        %v470 = vpack.c.b16 %v425, %v422
        %v471 = vpack.c.b16 %v429, %v426
        %v472 = vpack.c.b16 %v430, %v427
        %v473 = vpack.c.b16 %v431, %v428
        %v474 = vpack.c.b16 %v435, %v432
        %v475 = vpack.c.b16 %v436, %v433
        %v476 = vpack.c.b16 %v437, %v434
        %v477 = vpack.c.b16 %v441, %v438
        %v478 = vpack.c.b16 %v442, %v439
        %v479 = vpack.c.b16 %v443, %v440
        %v480 = vpack.c.b16 %v447, %v444
        %v481 = vpack.c.b16 %v448, %v445
        %v482 = vpack.c.b16 %v449, %v446
        %v483 = vpack.c.b16 %v453, %v450
        %v484 = vpack.c.b16 %v454, %v451
        %v485 = vpack.c.b16 %v455, %v452
        %v564 = vunpack.c.l.b16 %v301
        %v565 = vunpack.c.l.b16 %v302
        %v566 = vunpack.c.l.b16 %v303
        %v567 = vunpack.c.l.b16 %v304
        %v568 = vunpack.c.l.b16 %v305
        %v569 = vunpack.c.l.b16 %v306
        %v570 = vunpack.c.l.b16 %v307
        %v571 = vunpack.c.l.b16 %v308
        %v572 = vunpack.c.l.b16 %v309
        %v573 = vunpack.c.l.b16 %v310
        %v574 = vunpack.c.l.b16 %v311
        %v575 = vunpack.c.l.b16 %v312
        %v576 = vunpack.c.l.b16 %v313
        %v577 = vunpack.c.l.b16 %v314
        %v578 = vunpack.c.l.b16 %v315
        %v579 = vunpack.c.l.b16 %v316
        %v580 = vunpack.c.l.b16 %v317
        %v581 = vunpack.c.l.b16 %v318
        %v582 = vunpack.c.l.b16 %v319
        %v583 = vunpack.c.l.b16 %v320
        %v584 = vunpack.c.l.b16 %v321
        %v585 = vunpack.c.l.b16 %v322
        %v586 = vunpack.c.l.b16 %v323
        %v587 = vunpack.c.l.b16 %v324
        %v588 = vunpack.c.l.b16 %v325
        %v589 = vunpack.c.l.b16 %v326
        %v590 = vunpack.c.l.b16 %v327
        %v591 = vunpack.c.l.b16 %v328
        %v592 = vunpack.c.l.b16 %v329
        %v593 = vunpack.c.l.b16 %v330
        %v594 = vunpack.c.l.b16 %v331
        %v595 = vunpack.c.l.b16 %v332
        %v596 = vunpack.c.l.b16 %v333
        %v597 = vunpack.c.l.b16 %v334
        %v598 = vunpack.c.l.b16 %v335
        %v599 = vunpack.c.l.b16 %v336
        %v600 = vunpack.c.l.b16 %v337
        %v601 = vunpack.c.l.b16 %v338
        %v602 = vunpack.c.l.b16 %v339
        %v603 = vunpack.c.l.b16 %v340
        %v604 = vunpack.c.l.b16 %v341
        %v605 = vunpack.c.l.b16 %v342
        %v606 = vunpack.c.l.b16 %v343
        %v607 = vunpack.c.l.b16 %v344
        %v608 = vunpack.c.l.b16 %v345
        %v609 = vunpack.c.l.b16 %v346
        %v610 = vunpack.c.l.b16 %v347
        %v611 = vunpack.c.l.b16 %v348
        %v612 = vpack.c.b16 %v565, %v564
        %v613 = vpack.c.b16 %v567, %v566
        %v614 = vpack.c.b16 %v569, %v568
        %v615 = vpack.c.b16 %v571, %v570
        %v616 = vpack.c.b16 %v573, %v572
        %v617 = vpack.c.b16 %v575, %v574
        %v618 = vpack.c.b16 %v577, %v576
        %v619 = vpack.c.b16 %v579, %v578
        %v620 = vpack.c.b16 %v581, %v580
        %v621 = vpack.c.b16 %v583, %v582
        %v622 = vpack.c.b16 %v585, %v584
        %v623 = vpack.c.b16 %v587, %v586
        %v624 = vpack.c.b16 %v589, %v588
        %v625 = vpack.c.b16 %v591, %v590
        %v626 = vpack.c.b16 %v593, %v592
        %v627 = vpack.c.b16 %v595, %v594
        %v628 = vpack.c.b16 %v597, %v596
        %v629 = vpack.c.b16 %v599, %v598
        %v630 = vpack.c.b16 %v601, %v600
        %v631 = vpack.c.b16 %v603, %v602
        %v632 = vpack.c.b16 %v605, %v604
        %v633 = vpack.c.b16 %v607, %v606
        %v634 = vpack.c.b16 %v609, %v608
        %v635 = vpack.c.b16 %v611, %v610
        %660 = vmatprep.subr.bf16.mxu0 0
        %661 = vmatpush1.bf16.msra.mxu0 %v612
        %662 = vmatprep.subr.bf16.mxu0 0
        %663 = vmatpush1.bf16.msra.mxu0 %v613
        %664 = vmatprep.subr.bf16.mxu0 0
        %665 = vmatpush1.bf16.msra.mxu0 %v614
        %666 = vmatprep.subr.bf16.mxu0 0
        %667 = vmatpush1.bf16.msra.mxu0 %v615
        %668 = vmatprep.subr.bf16.mxu0 0
        %669 = vmatpush1.bf16.msra.mxu0 %v616
        %670 = vmatprep.subr.bf16.mxu0 0
        %671 = vmatpush1.bf16.msra.mxu0 %v617
        %672 = vmatprep.subr.bf16.mxu0 0
        %673 = vmatpush1.bf16.msra.mxu0 %v618
        %674 = vmatprep.subr.bf16.mxu0 0
        %675 = vmatpush1.bf16.msra.mxu0 %v619
        %676 = vmatprep.subr.bf16.mxu0 0
        %677 = vmatpush1.bf16.msra.mxu0 %v620
        %678 = vmatprep.subr.bf16.mxu0 0
        %679 = vmatpush1.bf16.msra.mxu0 %v621
        %680 = vmatprep.subr.bf16.mxu0 0
        %681 = vmatpush1.bf16.msra.mxu0 %v622
        %682 = vmatprep.subr.bf16.mxu0 0
        %683 = vmatpush1.bf16.msra.mxu0 %v623
        %684 = vmatprep.subr.bf16.mxu0 0
        %685 = vmatpush1.bf16.msra.mxu0 %v624
        %686 = vmatprep.subr.bf16.mxu0 0
        %687 = vmatpush1.bf16.msra.mxu0 %v625
        %688 = vmatprep.subr.bf16.mxu0 0
        %689 = vmatpush1.bf16.msra.mxu0 %v626
        %690 = vmatprep.subr.bf16.mxu0 0
        %691 = vmatpush1.bf16.msra.mxu0 %v627
        %692 = vmatprep.mubr.bf16.mxu0 %v457
        %693 = vmatmul.mubr.bf16.gmra.mrb[0].mxu0 %v456
        %v694 = vpop.f32.mrb[0].mxu0
        %v695 = vadd.f32 %v354, %v694
        %v696 = vpop.f32.mrb[0].mxu0
        %v697 = vpop.f32.mrb[0].mxu0
        %v698 = vadd.f32 %v354, %v697
        %v699 = vpop.f32.mrb[0].mxu0
        %700 = vmatprep.mubr.bf16.mxu0 %v460
        %701 = vmatmul.mubr.bf16.gmra.mrb[0].mxu0 %v459
        %v702 = vpop.f32.mrb[0].mxu0
        %v703 = vadd.f32 %v354, %v702
        %v704 = vpop.f32.mrb[0].mxu0
        %v705 = vpop.f32.mrb[0].mxu0
        %v706 = vadd.f32 %v354, %v705
        %v707 = vpop.f32.mrb[0].mxu0
        %708 = vmatprep.mubr.bf16.mxu0 %v463
        %709 = vmatmul.mubr.bf16.gmra.mrb[0].mxu0 %v462
        %v710 = vpop.f32.mrb[0].mxu0
        %v711 = vadd.f32 %v354, %v710
        %v712 = vpop.f32.mrb[0].mxu0
        %v713 = vpop.f32.mrb[0].mxu0
        %v714 = vadd.f32 %v354, %v713
        %v715 = vpop.f32.mrb[0].mxu0
        %716 = vmatprep.mubr.bf16.mxu0 %v466
        %717 = vmatmul.mubr.bf16.gmra.mrb[0].mxu0 %v465
        %v718 = vpop.f32.mrb[0].mxu0
        %v719 = vadd.f32 %v354, %v718
        %v720 = vpop.f32.mrb[0].mxu0
        %v721 = vpop.f32.mrb[0].mxu0
        %v722 = vadd.f32 %v354, %v721
        %v723 = vpop.f32.mrb[0].mxu0
        %724 = vmatprep.mubr.bf16.mxu0 %v469
        %725 = vmatmul.mubr.bf16.gmra.mrb[0].mxu0 %v468
        %v726 = vpop.f32.mrb[0].mxu0
        %v727 = vadd.f32 %v354, %v726
        %v728 = vpop.f32.mrb[0].mxu0
        %v729 = vpop.f32.mrb[0].mxu0
        %v730 = vadd.f32 %v354, %v729
        %v731 = vpop.f32.mrb[0].mxu0
        %732 = vmatprep.mubr.bf16.mxu0 %v472
        %733 = vmatmul.mubr.bf16.gmra.mrb[0].mxu0 %v471
        %v734 = vpop.f32.mrb[0].mxu0
        %v735 = vadd.f32 %v354, %v734
        %v736 = vpop.f32.mrb[0].mxu0
        %v737 = vpop.f32.mrb[0].mxu0
        %v738 = vadd.f32 %v354, %v737
        %v739 = vpop.f32.mrb[0].mxu0
        %740 = vmatprep.mubr.bf16.mxu0 %v475
        %741 = vmatmul.mubr.bf16.gmra.mrb[0].mxu0 %v474
        %v742 = vpop.f32.mrb[0].mxu0
        %v743 = vadd.f32 %v354, %v742
        %v744 = vpop.f32.mrb[0].mxu0
        %v745 = vpop.f32.mrb[0].mxu0
        %v746 = vadd.f32 %v354, %v745
        %v747 = vpop.f32.mrb[0].mxu0
        %748 = vmatprep.mubr.bf16.mxu0 %v478
        %749 = vmatmul.mubr.bf16.gmra.mrb[0].mxu0 %v477
        %v750 = vpop.f32.mrb[0].mxu0
        %v751 = vadd.f32 %v354, %v750
        %v752 = vpop.f32.mrb[0].mxu0
        %v753 = vpop.f32.mrb[0].mxu0
        %v754 = vadd.f32 %v354, %v753
        %v755 = vpop.f32.mrb[0].mxu0
        %756 = vmatprep.mubr.bf16.mxu0 %v481
        %757 = vmatmul.mubr.bf16.gmra.mrb[0].mxu0 %v480
        %v758 = vpop.f32.mrb[0].mxu0
        %v759 = vadd.f32 %v354, %v758
        %v760 = vpop.f32.mrb[0].mxu0
        %v761 = vpop.f32.mrb[0].mxu0
        %v762 = vadd.f32 %v354, %v761
        %v763 = vpop.f32.mrb[0].mxu0
        %764 = vmatprep.mubr.bf16.mxu0 %v484
        %765 = vmatmul.mubr.bf16.gmra.mrb[0].mxu0 %v483
        %v766 = vpop.f32.mrb[0].mxu0
        %v767 = vadd.f32 %v354, %v766
        %v768 = vpop.f32.mrb[0].mxu0
        %v769 = vpop.f32.mrb[0].mxu0
        %v770 = vadd.f32 %v354, %v769
        %v771 = vpop.f32.mrb[0].mxu0
        %772 = vdwg.mxu0
        %773 = vmatprep.subr.bf16.mxu0 0
        %774 = vmatpush1.bf16.msra.mxu0 %v628
        %775 = vmatprep.subr.bf16.mxu0 0
        %776 = vmatpush1.bf16.msra.mxu0 %v629
        %777 = vmatprep.subr.bf16.mxu0 0
        %778 = vmatpush1.bf16.msra.mxu0 %v630
        %779 = vmatprep.subr.bf16.mxu0 0
        %780 = vmatpush1.bf16.msra.mxu0 %v631
        %781 = vmatprep.subr.bf16.mxu0 0
        %782 = vmatpush1.bf16.msra.mxu0 %v632
        %783 = vmatprep.subr.bf16.mxu0 0
        %784 = vmatpush1.bf16.msra.mxu0 %v633
        %785 = vmatprep.subr.bf16.mxu0 0
        %786 = vmatpush1.bf16.msra.mxu0 %v634
        %787 = vmatprep.subr.bf16.mxu0 0
        %788 = vmatpush1.bf16.msra.mxu0 %v635
        %789 = vmatprep.subr.bf16.mxu0 0
        %790 = vmatpush1.bf16.msra.mxu0 0
        %791 = vmatprep.subr.bf16.mxu0 0
        %792 = vmatpush1.bf16.msra.mxu0 0
        %793 = vmatprep.subr.bf16.mxu0 0
        %794 = vmatpush1.bf16.msra.mxu0 0
        %795 = vmatprep.subr.bf16.mxu0 0
        %796 = vmatpush1.bf16.msra.mxu0 0
        %797 = vmatprep.subr.bf16.mxu0 0
        %798 = vmatpush1.bf16.msra.mxu0 0
        %799 = vmatprep.subr.bf16.mxu0 0
        %800 = vmatpush1.bf16.msra.mxu0 0
        %801 = vmatprep.subr.bf16.mxu0 0
        %802 = vmatpush1.bf16.msra.mxu0 0
        %803 = vmatprep.subr.bf16.mxu0 0
        %804 = vmatpush1.bf16.msra.mxu0 0
        %805 = vmatprep.mubr.bf16.mxu0 0
        %806 = vmatmul.mubr.bf16.gmra.mrb[0].mxu0 %v458
        %v807 = vpop.f32.mrb[0].mxu0
        %v808 = vadd.f32 %v695, %v807
        %v809 = vpop.f32.mrb[0].mxu0
        %v810 = vpop.f32.mrb[0].mxu0
        %v811 = vadd.f32 %v698, %v810
        %v812 = vpop.f32.mrb[0].mxu0
        %813 = vmatprep.mubr.bf16.mxu0 0
        %814 = vmatmul.mubr.bf16.gmra.mrb[0].mxu0 %v461
        %v815 = vpop.f32.mrb[0].mxu0
        %v816 = vadd.f32 %v703, %v815
        %v817 = vpop.f32.mrb[0].mxu0
        %v818 = vpop.f32.mrb[0].mxu0
        %v819 = vadd.f32 %v706, %v818
        %v820 = vpop.f32.mrb[0].mxu0
        %821 = vmatprep.mubr.bf16.mxu0 0
        %822 = vmatmul.mubr.bf16.gmra.mrb[0].mxu0 %v464
        %v823 = vpop.f32.mrb[0].mxu0
        %v824 = vadd.f32 %v711, %v823
        %v825 = vpop.f32.mrb[0].mxu0
        %v826 = vpop.f32.mrb[0].mxu0
        %v827 = vadd.f32 %v714, %v826
        %v828 = vpop.f32.mrb[0].mxu0
        %829 = vmatprep.mubr.bf16.mxu0 0
        %830 = vmatmul.mubr.bf16.gmra.mrb[0].mxu0 %v467
        %v831 = vpop.f32.mrb[0].mxu0
        %v832 = vadd.f32 %v719, %v831
        %v833 = vpop.f32.mrb[0].mxu0
        %v834 = vpop.f32.mrb[0].mxu0
        %v835 = vadd.f32 %v722, %v834
        %v836 = vpop.f32.mrb[0].mxu0
        %837 = vmatprep.mubr.bf16.mxu0 0
        %838 = vmatmul.mubr.bf16.gmra.mrb[0].mxu0 %v470
        %v839 = vpop.f32.mrb[0].mxu0
        %v840 = vadd.f32 %v727, %v839
        %v841 = vpop.f32.mrb[0].mxu0
        %v842 = vpop.f32.mrb[0].mxu0
        %v843 = vadd.f32 %v730, %v842
        %v844 = vpop.f32.mrb[0].mxu0
        %845 = vmatprep.mubr.bf16.mxu0 0
        %846 = vmatmul.mubr.bf16.gmra.mrb[0].mxu0 %v473
        %v847 = vpop.f32.mrb[0].mxu0
        %v848 = vadd.f32 %v735, %v847
        %v849 = vpop.f32.mrb[0].mxu0
        %v850 = vpop.f32.mrb[0].mxu0
        %v851 = vadd.f32 %v738, %v850
        %v852 = vpop.f32.mrb[0].mxu0
        %853 = vmatprep.mubr.bf16.mxu0 0
        %854 = vmatmul.mubr.bf16.gmra.mrb[0].mxu0 %v476
        %v855 = vpop.f32.mrb[0].mxu0
        %v856 = vadd.f32 %v743, %v855
        %v857 = vpop.f32.mrb[0].mxu0
        %v858 = vpop.f32.mrb[0].mxu0
        %v859 = vadd.f32 %v746, %v858
        %v860 = vpop.f32.mrb[0].mxu0
        %861 = vmatprep.mubr.bf16.mxu0 0
        %862 = vmatmul.mubr.bf16.gmra.mrb[0].mxu0 %v479
        %v863 = vpop.f32.mrb[0].mxu0
        %v864 = vadd.f32 %v751, %v863
        %v865 = vpop.f32.mrb[0].mxu0
        %v866 = vpop.f32.mrb[0].mxu0
        %v867 = vadd.f32 %v754, %v866
        %v868 = vpop.f32.mrb[0].mxu0
        %869 = vmatprep.mubr.bf16.mxu0 0
        %870 = vmatmul.mubr.bf16.gmra.mrb[0].mxu0 %v482
        %v871 = vpop.f32.mrb[0].mxu0
        %v872 = vadd.f32 %v759, %v871
        %v873 = vpop.f32.mrb[0].mxu0
        %v874 = vpop.f32.mrb[0].mxu0
        %v875 = vadd.f32 %v762, %v874
        %v876 = vpop.f32.mrb[0].mxu0
        %877 = vmatprep.mubr.bf16.mxu0 0
        %878 = vmatmul.mubr.bf16.gmra.mrb[0].mxu0 %v485
        %v879 = vpop.f32.mrb[0].mxu0
        %v880 = vadd.f32 %v767, %v879
        %v881 = vpop.f32.mrb[0].mxu0
        %v882 = vpop.f32.mrb[0].mxu0
        %v883 = vadd.f32 %v770, %v882
        %v884 = vpop.f32.mrb[0].mxu0
        %885 = vdwg.mxu0
        %v886 = vtanh.pop %v808
        %v887 = vtanh.pop %v811
        %v888 = vtanh.pop %v816
        %v889 = vtanh.pop %v819
        %v890 = vtanh.pop %v824
        %v891 = vtanh.pop %v827
        %v892 = vtanh.pop %v832
        %v893 = vtanh.pop %v835
        %v894 = vtanh.pop %v840
        %v895 = vtanh.pop %v843
        %v896 = vtanh.pop %v848
        %v897 = vtanh.pop %v851
        %v898 = vtanh.pop %v856
        %v899 = vtanh.pop %v859
        %v900 = vtanh.pop %v864
        %v901 = vtanh.pop %v867
        %v902 = vtanh.pop %v872
        %v903 = vtanh.pop %v875
        %v904 = vtanh.pop %v880
        %v905 = vtanh.pop %v883
        %v906 = vld [vmem:[%s3] sm:$0x1]
        %v908 = vlaneseq
        %v909 = vshrl.u32 %v908, 7
        %v910 = vsub.s32 0, %v909
        %v911 = vrot.slane %v906, %v910
        %v913 = vmul.f32 %v886, %v911
        %v914 = vmul.f32 %v887, %v911
        %v915 = vmul.f32 %v888, %v911
        %v916 = vmul.f32 %v889, %v911
        %v917 = vmul.f32 %v890, %v911
        %v918 = vmul.f32 %v891, %v911
        %v919 = vmul.f32 %v892, %v911
        %v920 = vmul.f32 %v893, %v911
        %v921 = vmul.f32 %v894, %v911
        %v922 = vmul.f32 %v895, %v911
        %v923 = vmul.f32 %v896, %v911
        %v924 = vmul.f32 %v897, %v911
        %v925 = vmul.f32 %v898, %v911
        %v926 = vmul.f32 %v899, %v911
        %v927 = vmul.f32 %v900, %v911
        %v928 = vmul.f32 %v901, %v911
        %v929 = vmul.f32 %v902, %v911
        %v930 = vmul.f32 %v903, %v911
        %v931 = vmul.f32 %v904, %v911
        %v932 = vmul.f32 %v905, %v911
        %vm933 = vcmask 523264
        %v934 = vsel %vm933, %v913, 0.0
        %935 = vadd.xlane.f32.xlu0 %v934
        %v936 = vpop.xlane.xlu0 %935
        %v937 = vsel %vm933, %v914, 0.0
        %938 = vadd.xlane.f32.xlu0 %v937
        %v939 = vpop.xlane.xlu0 %938
        %v940 = vsel %vm933, %v915, 0.0
        %941 = vadd.xlane.f32.xlu0 %v940
        %v942 = vpop.xlane.xlu0 %941
        %v943 = vsel %vm933, %v916, 0.0
        %944 = vadd.xlane.f32.xlu0 %v943
        %v945 = vpop.xlane.xlu0 %944
        %v946 = vsel %vm933, %v917, 0.0
        %947 = vadd.xlane.f32.xlu0 %v946
        %v948 = vpop.xlane.xlu0 %947
        %v949 = vsel %vm933, %v918, 0.0
        %950 = vadd.xlane.f32.xlu0 %v949
        %v951 = vpop.xlane.xlu0 %950
        %v952 = vsel %vm933, %v919, 0.0
        %953 = vadd.xlane.f32.xlu0 %v952
        %v954 = vpop.xlane.xlu0 %953
        %v955 = vsel %vm933, %v920, 0.0
        %956 = vadd.xlane.f32.xlu0 %v955
        %v957 = vpop.xlane.xlu0 %956
        %v958 = vsel %vm933, %v921, 0.0
        %959 = vadd.xlane.f32.xlu0 %v958
        %v960 = vpop.xlane.xlu0 %959
        %v961 = vsel %vm933, %v922, 0.0
        %962 = vadd.xlane.f32.xlu0 %v961
        %v963 = vpop.xlane.xlu0 %962
        %v964 = vsel %vm933, %v923, 0.0
        %965 = vadd.xlane.f32.xlu0 %v964
        %v966 = vpop.xlane.xlu0 %965
        %v967 = vsel %vm933, %v924, 0.0
        %968 = vadd.xlane.f32.xlu0 %v967
        %v969 = vpop.xlane.xlu0 %968
        %v970 = vsel %vm933, %v925, 0.0
        %971 = vadd.xlane.f32.xlu0 %v970
        %v972 = vpop.xlane.xlu0 %971
        %v973 = vsel %vm933, %v926, 0.0
        %974 = vadd.xlane.f32.xlu0 %v973
        %v975 = vpop.xlane.xlu0 %974
        %v976 = vsel %vm933, %v927, 0.0
        %977 = vadd.xlane.f32.xlu0 %v976
        %v978 = vpop.xlane.xlu0 %977
        %v979 = vsel %vm933, %v928, 0.0
        %980 = vadd.xlane.f32.xlu0 %v979
        %v981 = vpop.xlane.xlu0 %980
        %v982 = vsel %vm933, %v929, 0.0
        %983 = vadd.xlane.f32.xlu0 %v982
        %v984 = vpop.xlane.xlu0 %983
        %v985 = vsel %vm933, %v930, 0.0
        %986 = vadd.xlane.f32.xlu0 %v985
        %v987 = vpop.xlane.xlu0 %986
        %v988 = vsel %vm933, %v931, 0.0
        %989 = vadd.xlane.f32.xlu0 %v988
        %v990 = vpop.xlane.xlu0 %989
        %v991 = vsel %vm933, %v932, 0.0
        %992 = vadd.xlane.f32.xlu0 %v991
        %v993 = vpop.xlane.xlu0 %992
        %v994 = vld [vmem:[#allocation2] sm:$0x1]
        %v996 = vlaneseq
        %v997 = vshrl.u32 %v996, 7
        %v998 = vsub.s32 0, %v997
        %v999 = vrot.slane %v994, %v998
        %v1001 = vadd.f32 %v936, %v999
        %v1002 = vadd.f32 %v939, %v999
        %v1003 = vadd.f32 %v942, %v999
        %v1004 = vadd.f32 %v945, %v999
        %v1005 = vadd.f32 %v948, %v999
        %v1006 = vadd.f32 %v951, %v999
        %v1007 = vadd.f32 %v954, %v999
        %v1008 = vadd.f32 %v957, %v999
        %v1009 = vadd.f32 %v960, %v999
        %v1010 = vadd.f32 %v963, %v999
        %v1011 = vadd.f32 %v966, %v999
        %v1012 = vadd.f32 %v969, %v999
        %v1013 = vadd.f32 %v972, %v999
        %v1014 = vadd.f32 %v975, %v999
        %v1015 = vadd.f32 %v978, %v999
        %v1016 = vadd.f32 %v981, %v999
        %v1017 = vadd.f32 %v984, %v999
        %v1018 = vadd.f32 %v987, %v999
        %v1019 = vadd.f32 %v990, %v999
        %v1020 = vadd.f32 %v993, %v999
        %v1021 = vand.u32 2147483647, %v1001
        %v1022 = vand.u32 2147483647, %v1002
        %v1023 = vand.u32 2147483647, %v1003
        %v1024 = vand.u32 2147483647, %v1004
        %v1025 = vand.u32 2147483647, %v1005
        %v1026 = vand.u32 2147483647, %v1006
        %v1027 = vand.u32 2147483647, %v1007
        %v1028 = vand.u32 2147483647, %v1008
        %v1029 = vand.u32 2147483647, %v1009
        %v1030 = vand.u32 2147483647, %v1010
        %v1031 = vand.u32 2147483647, %v1011
        %v1032 = vand.u32 2147483647, %v1012
        %v1033 = vand.u32 2147483647, %v1013
        %v1034 = vand.u32 2147483647, %v1014
        %v1035 = vand.u32 2147483647, %v1015
        %v1036 = vand.u32 2147483647, %v1016
        %v1037 = vand.u32 2147483647, %v1017
        %v1038 = vand.u32 2147483647, %v1018
        %v1039 = vand.u32 2147483647, %v1019
        %v1040 = vand.u32 2147483647, %v1020
        %v1041 = vsub.f32 0.0, %v1021
        %v1042 = vsub.f32 0.0, %v1022
        %v1043 = vsub.f32 0.0, %v1023
        %v1044 = vsub.f32 0.0, %v1024
        %v1045 = vsub.f32 0.0, %v1025
        %v1046 = vsub.f32 0.0, %v1026
        %v1047 = vsub.f32 0.0, %v1027
        %v1048 = vsub.f32 0.0, %v1028
        %v1049 = vsub.f32 0.0, %v1029
        %v1050 = vsub.f32 0.0, %v1030
        %v1051 = vsub.f32 0.0, %v1031
        %v1052 = vsub.f32 0.0, %v1032
        %v1053 = vsub.f32 0.0, %v1033
        %v1054 = vsub.f32 0.0, %v1034
        %v1055 = vsub.f32 0.0, %v1035
        %v1056 = vsub.f32 0.0, %v1036
        %v1057 = vsub.f32 0.0, %v1037
        %v1058 = vsub.f32 0.0, %v1038
        %v1059 = vsub.f32 0.0, %v1039
        %v1060 = vsub.f32 0.0, %v1040
        %v1061 = vmul.f32 %v1041, 1.442695
        %v1062 = vpow.pop %v1061
        %v1063 = vmul.f32 %v1042, 1.442695
        %v1064 = vpow.pop %v1063
        %v1065 = vmul.f32 %v1043, 1.442695
        %v1066 = vpow.pop %v1065
        %v1067 = vmul.f32 %v1044, 1.442695
        %v1068 = vpow.pop %v1067
        %v1069 = vmul.f32 %v1045, 1.442695
        %v1070 = vpow.pop %v1069
        %v1071 = vmul.f32 %v1046, 1.442695
        %v1072 = vpow.pop %v1071
        %v1073 = vmul.f32 %v1047, 1.442695
        %v1074 = vpow.pop %v1073
        %v1075 = vmul.f32 %v1048, 1.442695
        %v1076 = vpow.pop %v1075
        %v1077 = vmul.f32 %v1049, 1.442695
        %v1078 = vpow.pop %v1077
        %v1079 = vmul.f32 %v1050, 1.442695
        %v1080 = vpow.pop %v1079
        %v1081 = vmul.f32 %v1051, 1.442695
        %v1082 = vpow.pop %v1081
        %v1083 = vmul.f32 %v1052, 1.442695
        %v1084 = vpow.pop %v1083
        %v1085 = vmul.f32 %v1053, 1.442695
        %v1086 = vpow.pop %v1085
        %v1087 = vmul.f32 %v1054, 1.442695
        %v1088 = vpow.pop %v1087
        %v1089 = vmul.f32 %v1055, 1.442695
        %v1090 = vpow.pop %v1089
        %v1091 = vmul.f32 %v1056, 1.442695
        %v1092 = vpow.pop %v1091
        %v1093 = vmul.f32 %v1057, 1.442695
        %v1094 = vpow.pop %v1093
        %v1095 = vmul.f32 %v1058, 1.442695
        %v1096 = vpow.pop %v1095
        %v1097 = vmul.f32 %v1059, 1.442695
        %v1098 = vpow.pop %v1097
        %v1099 = vmul.f32 %v1060, 1.442695
        %v1100 = vpow.pop %v1099
        %v1101 = vadd.f32 %v1062, 1.0
        %v1102 = vadd.f32 %v1064, 1.0
        %v1103 = vadd.f32 %v1066, 1.0
        %v1104 = vadd.f32 %v1068, 1.0
        %v1105 = vadd.f32 %v1070, 1.0
        %v1106 = vadd.f32 %v1072, 1.0
        %v1107 = vadd.f32 %v1074, 1.0
        %v1108 = vadd.f32 %v1076, 1.0
        %v1109 = vadd.f32 %v1078, 1.0
        %v1110 = vadd.f32 %v1080, 1.0
        %v1111 = vadd.f32 %v1082, 1.0
        %v1112 = vadd.f32 %v1084, 1.0
        %v1113 = vadd.f32 %v1086, 1.0
        %v1114 = vadd.f32 %v1088, 1.0
        %v1115 = vadd.f32 %v1090, 1.0
        %v1116 = vadd.f32 %v1092, 1.0
        %v1117 = vadd.f32 %v1094, 1.0
        %v1118 = vadd.f32 %v1096, 1.0
        %v1119 = vadd.f32 %v1098, 1.0
        %v1120 = vadd.f32 %v1100, 1.0
        %v1121 = vlog2.pop %v1101
        %v1122 = vmul.f32 %v1121, 0.6931472
        %v1123 = vlog2.pop %v1102
        %v1124 = vmul.f32 %v1123, 0.6931472
        %v1125 = vlog2.pop %v1103
        %v1126 = vmul.f32 %v1125, 0.6931472
        %v1127 = vlog2.pop %v1104
        %v1128 = vmul.f32 %v1127, 0.6931472
        %v1129 = vlog2.pop %v1105
        %v1130 = vmul.f32 %v1129, 0.6931472
        %v1131 = vlog2.pop %v1106
        %v1132 = vmul.f32 %v1131, 0.6931472
        %v1133 = vlog2.pop %v1107
        %v1134 = vmul.f32 %v1133, 0.6931472
        %v1135 = vlog2.pop %v1108
        %v1136 = vmul.f32 %v1135, 0.6931472
        %v1137 = vlog2.pop %v1109
        %v1138 = vmul.f32 %v1137, 0.6931472
        %v1139 = vlog2.pop %v1110
        %v1140 = vmul.f32 %v1139, 0.6931472
        %v1141 = vlog2.pop %v1111
        %v1142 = vmul.f32 %v1141, 0.6931472
        %v1143 = vlog2.pop %v1112
        %v1144 = vmul.f32 %v1143, 0.6931472
        %v1145 = vlog2.pop %v1113
        %v1146 = vmul.f32 %v1145, 0.6931472
        %v1147 = vlog2.pop %v1114
        %v1148 = vmul.f32 %v1147, 0.6931472
        %v1149 = vlog2.pop %v1115
        %v1150 = vmul.f32 %v1149, 0.6931472
        %v1151 = vlog2.pop %v1116
        %v1152 = vmul.f32 %v1151, 0.6931472
        %v1153 = vlog2.pop %v1117
        %v1154 = vmul.f32 %v1153, 0.6931472
        %v1155 = vlog2.pop %v1118
        %v1156 = vmul.f32 %v1155, 0.6931472
        %v1157 = vlog2.pop %v1119
        %v1158 = vmul.f32 %v1157, 0.6931472
        %v1159 = vlog2.pop %v1120
        %v1160 = vmul.f32 %v1159, 0.6931472
        %v1161 = vmax.f32 %v1001, 0.0
        %v1162 = vmax.f32 %v1002, 0.0
        %v1163 = vmax.f32 %v1003, 0.0
        %v1164 = vmax.f32 %v1004, 0.0
        %v1165 = vmax.f32 %v1005, 0.0
        %v1166 = vmax.f32 %v1006, 0.0
        %v1167 = vmax.f32 %v1007, 0.0
        %v1168 = vmax.f32 %v1008, 0.0
        %v1169 = vmax.f32 %v1009, 0.0
        %v1170 = vmax.f32 %v1010, 0.0
        %v1171 = vmax.f32 %v1011, 0.0
        %v1172 = vmax.f32 %v1012, 0.0
        %v1173 = vmax.f32 %v1013, 0.0
        %v1174 = vmax.f32 %v1014, 0.0
        %v1175 = vmax.f32 %v1015, 0.0
        %v1176 = vmax.f32 %v1016, 0.0
        %v1177 = vmax.f32 %v1017, 0.0
        %v1178 = vmax.f32 %v1018, 0.0
        %v1179 = vmax.f32 %v1019, 0.0
        %v1180 = vmax.f32 %v1020, 0.0
        %v1181 = vadd.f32 %v1161, %v1122
        %v1182 = vadd.f32 %v1162, %v1124
        %v1183 = vadd.f32 %v1163, %v1126
        %v1184 = vadd.f32 %v1164, %v1128
        %v1185 = vadd.f32 %v1165, %v1130
        %v1186 = vadd.f32 %v1166, %v1132
        %v1187 = vadd.f32 %v1167, %v1134
        %v1188 = vadd.f32 %v1168, %v1136
        %v1189 = vadd.f32 %v1169, %v1138
        %v1190 = vadd.f32 %v1170, %v1140
        %v1191 = vadd.f32 %v1171, %v1142
        %v1192 = vadd.f32 %v1172, %v1144
        %v1193 = vadd.f32 %v1173, %v1146
        %v1194 = vadd.f32 %v1174, %v1148
        %v1195 = vadd.f32 %v1175, %v1150
        %v1196 = vadd.f32 %v1176, %v1152
        %v1197 = vadd.f32 %v1177, %v1154
        %v1198 = vadd.f32 %v1178, %v1156
        %v1199 = vadd.f32 %v1179, %v1158
        %v1200 = vadd.f32 %v1180, %v1160
        %v1201 = vsub.f32 0.0, %v1001
        %v1202 = vsub.f32 0.0, %v1002
        %v1203 = vsub.f32 0.0, %v1003
        %v1204 = vsub.f32 0.0, %v1004
        %v1205 = vsub.f32 0.0, %v1005
        %v1206 = vsub.f32 0.0, %v1006
        %v1207 = vsub.f32 0.0, %v1007
        %v1208 = vsub.f32 0.0, %v1008
        %v1209 = vsub.f32 0.0, %v1009
        %v1210 = vsub.f32 0.0, %v1010
        %v1211 = vsub.f32 0.0, %v1011
        %v1212 = vsub.f32 0.0, %v1012
        %v1213 = vsub.f32 0.0, %v1013
        %v1214 = vsub.f32 0.0, %v1014
        %v1215 = vsub.f32 0.0, %v1015
        %v1216 = vsub.f32 0.0, %v1016
        %v1217 = vsub.f32 0.0, %v1017
        %v1218 = vsub.f32 0.0, %v1018
        %v1219 = vsub.f32 0.0, %v1019
        %v1220 = vsub.f32 0.0, %v1020
        %v1221 = vmax.f32 %v1201, 0.0
        %v1222 = vmax.f32 %v1202, 0.0
        %v1223 = vmax.f32 %v1203, 0.0
        %v1224 = vmax.f32 %v1204, 0.0
        %v1225 = vmax.f32 %v1205, 0.0
        %v1226 = vmax.f32 %v1206, 0.0
        %v1227 = vmax.f32 %v1207, 0.0
        %v1228 = vmax.f32 %v1208, 0.0
        %v1229 = vmax.f32 %v1209, 0.0
        %v1230 = vmax.f32 %v1210, 0.0
        %v1231 = vmax.f32 %v1211, 0.0
        %v1232 = vmax.f32 %v1212, 0.0
        %v1233 = vmax.f32 %v1213, 0.0
        %v1234 = vmax.f32 %v1214, 0.0
        %v1235 = vmax.f32 %v1215, 0.0
        %v1236 = vmax.f32 %v1216, 0.0
        %v1237 = vmax.f32 %v1217, 0.0
        %v1238 = vmax.f32 %v1218, 0.0
        %v1239 = vmax.f32 %v1219, 0.0
        %v1240 = vmax.f32 %v1220, 0.0
        %v1241 = vadd.f32 %v1221, %v1122
        %v1242 = vadd.f32 %v1222, %v1124
        %v1243 = vadd.f32 %v1223, %v1126
        %v1244 = vadd.f32 %v1224, %v1128
        %v1245 = vadd.f32 %v1225, %v1130
        %v1246 = vadd.f32 %v1226, %v1132
        %v1247 = vadd.f32 %v1227, %v1134
        %v1248 = vadd.f32 %v1228, %v1136
        %v1249 = vadd.f32 %v1229, %v1138
        %v1250 = vadd.f32 %v1230, %v1140
        %v1251 = vadd.f32 %v1231, %v1142
        %v1252 = vadd.f32 %v1232, %v1144
        %v1253 = vadd.f32 %v1233, %v1146
        %v1254 = vadd.f32 %v1234, %v1148
        %v1255 = vadd.f32 %v1235, %v1150
        %v1256 = vadd.f32 %v1236, %v1152
        %v1257 = vadd.f32 %v1237, %v1154
        %v1258 = vadd.f32 %v1238, %v1156
        %v1259 = vadd.f32 %v1239, %v1158
        %v1260 = vadd.f32 %v1240, %v1160
        %v1261 = vsub.f32 0.0, %v1181
        %v1262 = vsub.f32 0.0, %v1182
        %v1263 = vsub.f32 0.0, %v1183
        %v1264 = vsub.f32 0.0, %v1184
        %v1265 = vsub.f32 0.0, %v1185
        %v1266 = vsub.f32 0.0, %v1186
        %v1267 = vsub.f32 0.0, %v1187
        %v1268 = vsub.f32 0.0, %v1188
        %v1269 = vsub.f32 0.0, %v1189
        %v1270 = vsub.f32 0.0, %v1190
        %v1271 = vsub.f32 0.0, %v1191
        %v1272 = vsub.f32 0.0, %v1192
        %v1273 = vsub.f32 0.0, %v1193
        %v1274 = vsub.f32 0.0, %v1194
        %v1275 = vsub.f32 0.0, %v1195
        %v1276 = vsub.f32 0.0, %v1196
        %v1277 = vsub.f32 0.0, %v1197
        %v1278 = vsub.f32 0.0, %v1198
        %v1279 = vsub.f32 0.0, %v1199
        %v1280 = vsub.f32 0.0, %v1200
        %vm1281 = vcmask 7168
        %1282 = vst.msk [vmem:[%s248] sm:$0xff] %vm1281, %v1261
        %1283 = vst.msk [vmem:[%s248 + $0x8] sm:$0xff] %vm1281, %v1262
        %1284 = vst.msk [vmem:[%s248 + $0x10] sm:$0xff] %vm1281, %v1263
        %1285 = vst.msk [vmem:[%s248 + $0x18] sm:$0xff] %vm1281, %v1264
        %1286 = vst.msk [vmem:[%s248 + $0x20] sm:$0xff] %vm1281, %v1265
        %1287 = vst.msk [vmem:[%s248 + $0x28] sm:$0xff] %vm1281, %v1266
        %1288 = vst.msk [vmem:[%s248 + $0x30] sm:$0xff] %vm1281, %v1267
        %1289 = vst.msk [vmem:[%s248 + $0x38] sm:$0xff] %vm1281, %v1268
        %1290 = vst.msk [vmem:[%s248 + $0x40] sm:$0xff] %vm1281, %v1269
        %1291 = vst.msk [vmem:[%s248 + $0x48] sm:$0xff] %vm1281, %v1270
        %1292 = vst.msk [vmem:[%s248 + $0x50] sm:$0xff] %vm1281, %v1271
        %1293 = vst.msk [vmem:[%s248 + $0x58] sm:$0xff] %vm1281, %v1272
        %1294 = vst.msk [vmem:[%s248 + $0x60] sm:$0xff] %vm1281, %v1273
        %1295 = vst.msk [vmem:[%s248 + $0x68] sm:$0xff] %vm1281, %v1274
        %1296 = vst.msk [vmem:[%s248 + $0x70] sm:$0xff] %vm1281, %v1275
        %1297 = vst.msk [vmem:[%s248 + $0x78] sm:$0xff] %vm1281, %v1276
        %1298 = vst.msk [vmem:[%s248 + $0x80] sm:$0xff] %vm1281, %v1277
        %1299 = vst.msk [vmem:[%s248 + $0x88] sm:$0xff] %vm1281, %v1278
        %1300 = vst.msk [vmem:[%s248 + $0x90] sm:$0xff] %vm1281, %v1279
        %1301 = vst.msk [vmem:[%s248 + $0x98] sm:$0xff] %vm1281, %v1280
        %v1302 = vsub.f32 0.0, %v1241
        %v1303 = vsub.f32 0.0, %v1242
        %v1304 = vsub.f32 0.0, %v1243
        %v1305 = vsub.f32 0.0, %v1244
        %v1306 = vsub.f32 0.0, %v1245
        %v1307 = vsub.f32 0.0, %v1246
        %v1308 = vsub.f32 0.0, %v1247
        %v1309 = vsub.f32 0.0, %v1248
        %v1310 = vsub.f32 0.0, %v1249
        %v1311 = vsub.f32 0.0, %v1250
        %v1312 = vsub.f32 0.0, %v1251
        %v1313 = vsub.f32 0.0, %v1252
        %v1314 = vsub.f32 0.0, %v1253
        %v1315 = vsub.f32 0.0, %v1254
        %v1316 = vsub.f32 0.0, %v1255
        %v1317 = vsub.f32 0.0, %v1256
        %v1318 = vsub.f32 0.0, %v1257
        %v1319 = vsub.f32 0.0, %v1258
        %v1320 = vsub.f32 0.0, %v1259
        %v1321 = vsub.f32 0.0, %v1260
        %1342 = vrot.lane.b32.xlu0 %v1302, 1
        %v1343 = vpop.permute.xlu0 %1342
        %1344 = vrot.lane.b32.xlu0 %v1303, 1
        %v1345 = vpop.permute.xlu0 %1344
        %1346 = vrot.lane.b32.xlu0 %v1304, 1
        %v1347 = vpop.permute.xlu0 %1346
        %1348 = vrot.lane.b32.xlu0 %v1305, 1
        %v1349 = vpop.permute.xlu0 %1348
        %1350 = vrot.lane.b32.xlu0 %v1306, 1
        %v1351 = vpop.permute.xlu0 %1350
        %1352 = vrot.lane.b32.xlu0 %v1307, 1
        %v1353 = vpop.permute.xlu0 %1352
        %1354 = vrot.lane.b32.xlu0 %v1308, 1
        %v1355 = vpop.permute.xlu0 %1354
        %1356 = vrot.lane.b32.xlu0 %v1309, 1
        %v1357 = vpop.permute.xlu0 %1356
        %1358 = vrot.lane.b32.xlu0 %v1310, 1
        %v1359 = vpop.permute.xlu0 %1358
        %1360 = vrot.lane.b32.xlu0 %v1311, 1
        %v1361 = vpop.permute.xlu0 %1360
        %1362 = vrot.lane.b32.xlu0 %v1312, 1
        %v1363 = vpop.permute.xlu0 %1362
        %1364 = vrot.lane.b32.xlu0 %v1313, 1
        %v1365 = vpop.permute.xlu0 %1364
        %1366 = vrot.lane.b32.xlu0 %v1314, 1
        %v1367 = vpop.permute.xlu0 %1366
        %1368 = vrot.lane.b32.xlu0 %v1315, 1
        %v1369 = vpop.permute.xlu0 %1368
        %1370 = vrot.lane.b32.xlu0 %v1316, 1
        %v1371 = vpop.permute.xlu0 %1370
        %1372 = vrot.lane.b32.xlu0 %v1317, 1
        %v1373 = vpop.permute.xlu0 %1372
        %1374 = vrot.lane.b32.xlu0 %v1318, 1
        %v1375 = vpop.permute.xlu0 %1374
        %1376 = vrot.lane.b32.xlu0 %v1319, 1
        %v1377 = vpop.permute.xlu0 %1376
        %1378 = vrot.lane.b32.xlu0 %v1320, 1
        %v1379 = vpop.permute.xlu0 %1378
        %1380 = vrot.lane.b32.xlu0 %v1321, 1
        %v1381 = vpop.permute.xlu0 %1380
        %vm1402 = vcmask 15368
        %1403 = vst.msk [vmem:[%s248] sm:$0xff] %vm1402, %v1343
        %1404 = vst.msk [vmem:[%s248 + $0x8] sm:$0xff] %vm1402, %v1345
        %1405 = vst.msk [vmem:[%s248 + $0x10] sm:$0xff] %vm1402, %v1347
        %1406 = vst.msk [vmem:[%s248 + $0x18] sm:$0xff] %vm1402, %v1349
        %1407 = vst.msk [vmem:[%s248 + $0x20] sm:$0xff] %vm1402, %v1351
        %1408 = vst.msk [vmem:[%s248 + $0x28] sm:$0xff] %vm1402, %v1353
        %1409 = vst.msk [vmem:[%s248 + $0x30] sm:$0xff] %vm1402, %v1355
        %1410 = vst.msk [vmem:[%s248 + $0x38] sm:$0xff] %vm1402, %v1357
        %1411 = vst.msk [vmem:[%s248 + $0x40] sm:$0xff] %vm1402, %v1359
        %1412 = vst.msk [vmem:[%s248 + $0x48] sm:$0xff] %vm1402, %v1361
        %1413 = vst.msk [vmem:[%s248 + $0x50] sm:$0xff] %vm1402, %v1363
        %1414 = vst.msk [vmem:[%s248 + $0x58] sm:$0xff] %vm1402, %v1365
        %1415 = vst.msk [vmem:[%s248 + $0x60] sm:$0xff] %vm1402, %v1367
        %1416 = vst.msk [vmem:[%s248 + $0x68] sm:$0xff] %vm1402, %v1369
        %1417 = vst.msk [vmem:[%s248 + $0x70] sm:$0xff] %vm1402, %v1371
        %1418 = vst.msk [vmem:[%s248 + $0x78] sm:$0xff] %vm1402, %v1373
        %1419 = vst.msk [vmem:[%s248 + $0x80] sm:$0xff] %vm1402, %v1375
        %1420 = vst.msk [vmem:[%s248 + $0x88] sm:$0xff] %vm1402, %v1377
        %1421 = vst.msk [vmem:[%s248 + $0x90] sm:$0xff] %vm1402, %v1379
        %1422 = vst.msk [vmem:[%s248 + $0x98] sm:$0xff] %vm1402, %v1381
        %s1423 = sand.u32 %s139, 1
        %s1424 = sand.u32 %s139, 1
        %s1425 = smul.addr %s1424, 160
        %s1426 = scalar_lea.vmem [#allocation5], %s1425
        // Predicated region
        $region45: #{tpu_custom_call.1} parent=39 // pred_check
          %p1427 = pneg %p149
        $region46: #{tpu_custom_call.1} parent=39 // pred_check_branch
          %1429 = sbr.rel (%p1427) target = $region48
        $region47: #{tpu_custom_call.1} parent=39 // pred_region
          %s1430 = smul.u32 20, %s21
          %s1431 = ssub.s32 38, %s1430
          %p1432 = scmp.lt.s32.totalorder %s1431, 20
          %s1433 = scalar_select %p1432, %s1431, 20
          %s1434 = smul.u32 128, %s1433
          %p1435 = scmp.ne.s32.totalorder 0, %s1434
          %s1436 = smul.addr %s1430, 8
          %s1437 = scalar_lea.vmem %s5, %s1436
          // Predicated region
          $region49: #{tpu_custom_call.1} parent=47 // pred_check
            %p1438 = pneg %p1435
          $region50: #{tpu_custom_call.1} parent=47 // pred_check_branch
            %1440 = sbr.rel (%p1438) target = $region52
          $region51: #{tpu_custom_call.1} parent=47 // pred_region
            // Predicated region
            $region53: #{tpu_custom_call.1} parent=51 // pred_check
              _
            $region54: #{tpu_custom_call.1} parent=51 // pred_check_branch
              %1442 = sbr.rel (0) target = $region56
            $region55: #{tpu_custom_call.1} parent=51 // pred_region
              // Predicated region
              $region75: #{tpu_custom_call.1} parent=55 // pred_check
                _
              $region76: #{tpu_custom_call.1} parent=55 // pred_check_branch
                %1530 = sbr.rel (0) target = $region78
              $region77: #{tpu_custom_call.1} parent=55 // pred_region
                %s1531 = sdiv.u32.pop %s1433, 20
                %s1532 = srem.u32.pop %s1433, 20
                // While loop
                $region79: #{tpu_custom_call.1} parent=77 // loop_pre_header
                  _
                $region80: #{tpu_custom_call.1} parent=77 // loop_header
                  %s1534 = sphi 0, %s1536
                  %p1535 = scmp.ge.s32.totalorder %s1534, %s1531
                  %s1539 = sphi 0, %s1584
                  %s1540 = sphi %s1426, %s1587
                  %s1541 = sphi %s1437, %s1588
                $region81: #{tpu_custom_call.1} parent=77 // loop_header_branch
                  %1538 = sbr.rel (%p1535) target = $region85
                $region82: #{tpu_custom_call.1} parent=77 // loop_body
                  %v1542 = vld [vmem:[%s1540] sm:$0xff]
                  %1543 = vst [vmem:[%s1541] sm:$0xff] %v1542
                  %v1544 = vld [vmem:[%s1540 + $0x8] sm:$0xff]
                  %1545 = vst [vmem:[%s1541 + $0x8] sm:$0xff] %v1544
                  %v1546 = vld [vmem:[%s1540 + $0x10] sm:$0xff]
                  %1547 = vst [vmem:[%s1541 + $0x10] sm:$0xff] %v1546
                  %v1548 = vld [vmem:[%s1540 + $0x18] sm:$0xff]
                  %1549 = vst [vmem:[%s1541 + $0x18] sm:$0xff] %v1548
                  %v1550 = vld [vmem:[%s1540 + $0x20] sm:$0xff]
                  %1551 = vst [vmem:[%s1541 + $0x20] sm:$0xff] %v1550
                  %v1552 = vld [vmem:[%s1540 + $0x28] sm:$0xff]
                  %1553 = vst [vmem:[%s1541 + $0x28] sm:$0xff] %v1552
                  %v1554 = vld [vmem:[%s1540 + $0x30] sm:$0xff]
                  %1555 = vst [vmem:[%s1541 + $0x30] sm:$0xff] %v1554
                  %v1556 = vld [vmem:[%s1540 + $0x38] sm:$0xff]
                  %1557 = vst [vmem:[%s1541 + $0x38] sm:$0xff] %v1556
                  %v1558 = vld [vmem:[%s1540 + $0x40] sm:$0xff]
                  %1559 = vst [vmem:[%s1541 + $0x40] sm:$0xff] %v1558
                  %v1560 = vld [vmem:[%s1540 + $0x48] sm:$0xff]
                  %1561 = vst [vmem:[%s1541 + $0x48] sm:$0xff] %v1560
                  %v1562 = vld [vmem:[%s1540 + $0x50] sm:$0xff]
                  %1563 = vst [vmem:[%s1541 + $0x50] sm:$0xff] %v1562
                  %v1564 = vld [vmem:[%s1540 + $0x58] sm:$0xff]
                  %1565 = vst [vmem:[%s1541 + $0x58] sm:$0xff] %v1564
                  %v1566 = vld [vmem:[%s1540 + $0x60] sm:$0xff]
                  %1567 = vst [vmem:[%s1541 + $0x60] sm:$0xff] %v1566
                  %v1568 = vld [vmem:[%s1540 + $0x68] sm:$0xff]
                  %1569 = vst [vmem:[%s1541 + $0x68] sm:$0xff] %v1568
                  %v1570 = vld [vmem:[%s1540 + $0x70] sm:$0xff]
                  %1571 = vst [vmem:[%s1541 + $0x70] sm:$0xff] %v1570
                  %v1572 = vld [vmem:[%s1540 + $0x78] sm:$0xff]
                  %1573 = vst [vmem:[%s1541 + $0x78] sm:$0xff] %v1572
                  %v1574 = vld [vmem:[%s1540 + $0x80] sm:$0xff]
                  %1575 = vst [vmem:[%s1541 + $0x80] sm:$0xff] %v1574
                  %v1576 = vld [vmem:[%s1540 + $0x88] sm:$0xff]
                  %1577 = vst [vmem:[%s1541 + $0x88] sm:$0xff] %v1576
                  %v1578 = vld [vmem:[%s1540 + $0x90] sm:$0xff]
                  %1579 = vst [vmem:[%s1541 + $0x90] sm:$0xff] %v1578
                  %v1580 = vld [vmem:[%s1540 + $0x98] sm:$0xff]
                  %1581 = vst [vmem:[%s1541 + $0x98] sm:$0xff] %v1580
                  %s1582 = sadd.s32 1, %s1539
                  %p1583 = scmp.ge.s32.totalorder %s1582, %s1531
                  %s1584 = scalar_select %p1583, 0, %s1582
                  %s1585 = smul.u32 %s1584, 160
                  %s1586 = smul.u32 %s1584, 160
                  %s1587 = scalar_lea.vmem %s1426, %s1585 [#allocation5]
                  %s1588 = scalar_lea.vmem %s1437, %s1586
                $region83: #{tpu_custom_call.1} parent=77 // loop_footer
                  %s1536 = sadd.s32 %s1534, 1
                $region84: #{tpu_custom_call.1} parent=77 // loop_footer_branch
                  %1533 = sbr.rel target = $region80
                $region85: #{tpu_custom_call.1} parent=77 // loop_exit
                  _
                %s1589 = sdiv.u32.pop %s1433, 20
                %s1590 = srem.u32.pop %s1433, 20
                %s1591 = smul.u32 %s1589, 20
                %s1592 = smul.u32 8, %s1591
                %s1593 = scalar_lea.vmem %s1426, %s1592 [#allocation5]
                %s1594 = smul.u32 8, %s1591
                %s1595 = scalar_lea.vmem %s1437, %s1594
                // While loop
                $region86: #{tpu_custom_call.1} parent=77 // loop_pre_header
                  _
                $region87: #{tpu_custom_call.1} parent=77 // loop_header
                  %s1597 = sphi 0, %s1599
                  %p1598 = scmp.ge.s32.totalorder %s1597, %s1590
                  %s1602 = sphi 0, %s1609
                  %s1603 = sphi %s1593, %s1612
                  %s1604 = sphi %s1595, %s1613
                $region88: #{tpu_custom_call.1} parent=77 // loop_header_branch
                  %1601 = sbr.rel (%p1598) target = $region92
                $region89: #{tpu_custom_call.1} parent=77 // loop_body
                  %v1605 = vld [vmem:[%s1603] sm:$0xff]
                  %1606 = vst [vmem:[%s1604] sm:$0xff] %v1605
                  %s1607 = sadd.s32 1, %s1602
                  %p1608 = scmp.ge.s32.totalorder %s1607, %s1590
                  %s1609 = scalar_select %p1608, 0, %s1607
                  %s1610 = smul.u32 %s1609, 8
                  %s1611 = smul.u32 %s1609, 8
                  %s1612 = scalar_lea.vmem %s1593, %s1610 [#allocation5]
                  %s1613 = scalar_lea.vmem %s1595, %s1611
                $region90: #{tpu_custom_call.1} parent=77 // loop_footer
                  %s1599 = sadd.s32 %s1597, 1
                $region91: #{tpu_custom_call.1} parent=77 // loop_footer_branch
                  %1596 = sbr.rel target = $region87
                $region92: #{tpu_custom_call.1} parent=77 // loop_exit
                  _
              $region78: #{tpu_custom_call.1} parent=55 // pred_fallthru
                _
              // Predicated region
              $region93: #{tpu_custom_call.1} parent=55 // pred_check
                _
              $region94: #{tpu_custom_call.1} parent=55 // pred_check_branch
                %1615 = sbr.rel target = $region96
              $region95: #{tpu_custom_call.1} parent=55 // pred_region
                _
              $region96: #{tpu_custom_call.1} parent=55 // pred_fallthru
                _
            $region56: #{tpu_custom_call.1} parent=51 // pred_fallthru
              _
            // Predicated region
            $region57: #{tpu_custom_call.1} parent=51 // pred_check
              _
            $region58: #{tpu_custom_call.1} parent=51 // pred_check_branch
              %1444 = sbr.rel target = $region60
            $region59: #{tpu_custom_call.1} parent=51 // pred_region
              %s1446 = sdiv.u32.pop %s1433, 20
              %s1447 = srem.u32.pop %s1433, 20
              // While loop
              $region61: #{tpu_custom_call.1} parent=59 // loop_pre_header
                _
              $region62: #{tpu_custom_call.1} parent=59 // loop_header
                %s1449 = sphi 0, %s1451
                %p1450 = scmp.ge.s32.totalorder %s1449, %s1446
                %s1454 = sphi 0, %s1499
                %s1455 = sphi %s1426, %s1502
                %s1456 = sphi %s1437, %s1503
              $region63: #{tpu_custom_call.1} parent=59 // loop_header_branch
                %1453 = sbr.rel (%p1450) target = $region67
              $region64: #{tpu_custom_call.1} parent=59 // loop_body
                %v1457 = vld [vmem:[%s1455] sm:$0xff]
                %1458 = vst [vmem:[%s1456] sm:$0xff] %v1457
                %v1459 = vld [vmem:[%s1455 + $0x8] sm:$0xff]
                %1460 = vst [vmem:[%s1456 + $0x8] sm:$0xff] %v1459
                %v1461 = vld [vmem:[%s1455 + $0x10] sm:$0xff]
                %1462 = vst [vmem:[%s1456 + $0x10] sm:$0xff] %v1461
                %v1463 = vld [vmem:[%s1455 + $0x18] sm:$0xff]
                %1464 = vst [vmem:[%s1456 + $0x18] sm:$0xff] %v1463
                %v1465 = vld [vmem:[%s1455 + $0x20] sm:$0xff]
                %1466 = vst [vmem:[%s1456 + $0x20] sm:$0xff] %v1465
                %v1467 = vld [vmem:[%s1455 + $0x28] sm:$0xff]
                %1468 = vst [vmem:[%s1456 + $0x28] sm:$0xff] %v1467
                %v1469 = vld [vmem:[%s1455 + $0x30] sm:$0xff]
                %1470 = vst [vmem:[%s1456 + $0x30] sm:$0xff] %v1469
                %v1471 = vld [vmem:[%s1455 + $0x38] sm:$0xff]
                %1472 = vst [vmem:[%s1456 + $0x38] sm:$0xff] %v1471
                %v1473 = vld [vmem:[%s1455 + $0x40] sm:$0xff]
                %1474 = vst [vmem:[%s1456 + $0x40] sm:$0xff] %v1473
                %v1475 = vld [vmem:[%s1455 + $0x48] sm:$0xff]
                %1476 = vst [vmem:[%s1456 + $0x48] sm:$0xff] %v1475
                %v1477 = vld [vmem:[%s1455 + $0x50] sm:$0xff]
                %1478 = vst [vmem:[%s1456 + $0x50] sm:$0xff] %v1477
                %v1479 = vld [vmem:[%s1455 + $0x58] sm:$0xff]
                %1480 = vst [vmem:[%s1456 + $0x58] sm:$0xff] %v1479
                %v1481 = vld [vmem:[%s1455 + $0x60] sm:$0xff]
                %1482 = vst [vmem:[%s1456 + $0x60] sm:$0xff] %v1481
                %v1483 = vld [vmem:[%s1455 + $0x68] sm:$0xff]
                %1484 = vst [vmem:[%s1456 + $0x68] sm:$0xff] %v1483
                %v1485 = vld [vmem:[%s1455 + $0x70] sm:$0xff]
                %1486 = vst [vmem:[%s1456 + $0x70] sm:$0xff] %v1485
                %v1487 = vld [vmem:[%s1455 + $0x78] sm:$0xff]
                %1488 = vst [vmem:[%s1456 + $0x78] sm:$0xff] %v1487
                %v1489 = vld [vmem:[%s1455 + $0x80] sm:$0xff]
                %1490 = vst [vmem:[%s1456 + $0x80] sm:$0xff] %v1489
                %v1491 = vld [vmem:[%s1455 + $0x88] sm:$0xff]
                %1492 = vst [vmem:[%s1456 + $0x88] sm:$0xff] %v1491
                %v1493 = vld [vmem:[%s1455 + $0x90] sm:$0xff]
                %1494 = vst [vmem:[%s1456 + $0x90] sm:$0xff] %v1493
                %v1495 = vld [vmem:[%s1455 + $0x98] sm:$0xff]
                %1496 = vst [vmem:[%s1456 + $0x98] sm:$0xff] %v1495
                %s1497 = sadd.s32 1, %s1454
                %p1498 = scmp.ge.s32.totalorder %s1497, %s1446
                %s1499 = scalar_select %p1498, 0, %s1497
                %s1500 = smul.u32 %s1499, 160
                %s1501 = smul.u32 %s1499, 160
                %s1502 = scalar_lea.vmem %s1426, %s1500 [#allocation5]
                %s1503 = scalar_lea.vmem %s1437, %s1501
              $region65: #{tpu_custom_call.1} parent=59 // loop_footer
                %s1451 = sadd.s32 %s1449, 1
              $region66: #{tpu_custom_call.1} parent=59 // loop_footer_branch
                %1448 = sbr.rel target = $region62
              $region67: #{tpu_custom_call.1} parent=59 // loop_exit
                _
              %s1504 = sdiv.u32.pop %s1433, 20
              %s1505 = srem.u32.pop %s1433, 20
              %s1506 = smul.u32 %s1504, 20
              %s1507 = smul.u32 8, %s1506
              %s1508 = scalar_lea.vmem %s1426, %s1507 [#allocation5]
              %s1509 = smul.u32 8, %s1506
              %s1510 = scalar_lea.vmem %s1437, %s1509
              // While loop
              $region68: #{tpu_custom_call.1} parent=59 // loop_pre_header
                _
              $region69: #{tpu_custom_call.1} parent=59 // loop_header
                %s1512 = sphi 0, %s1514
                %p1513 = scmp.ge.s32.totalorder %s1512, %s1505
                %s1517 = sphi 0, %s1524
                %s1518 = sphi %s1508, %s1527
                %s1519 = sphi %s1510, %s1528
              $region70: #{tpu_custom_call.1} parent=59 // loop_header_branch
                %1516 = sbr.rel (%p1513) target = $region74
              $region71: #{tpu_custom_call.1} parent=59 // loop_body
                %v1520 = vld [vmem:[%s1518] sm:$0xff]
                %1521 = vst [vmem:[%s1519] sm:$0xff] %v1520
                %s1522 = sadd.s32 1, %s1517
                %p1523 = scmp.ge.s32.totalorder %s1522, %s1505
                %s1524 = scalar_select %p1523, 0, %s1522
                %s1525 = smul.u32 %s1524, 8
                %s1526 = smul.u32 %s1524, 8
                %s1527 = scalar_lea.vmem %s1508, %s1525 [#allocation5]
                %s1528 = scalar_lea.vmem %s1510, %s1526
              $region72: #{tpu_custom_call.1} parent=59 // loop_footer
                %s1514 = sadd.s32 %s1512, 1
              $region73: #{tpu_custom_call.1} parent=59 // loop_footer_branch
                %1511 = sbr.rel target = $region69
              $region74: #{tpu_custom_call.1} parent=59 // loop_exit
                _
            $region60: #{tpu_custom_call.1} parent=51 // pred_fallthru
              _
          $region52: #{tpu_custom_call.1} parent=47 // pred_fallthru
            _
          %1616 = vnop
        $region48: #{tpu_custom_call.1} parent=39 // pred_fallthru
          _
      $region40: #{tpu_custom_call.1} parent=5 // pred_fallthru
        _
      %p1617 = scmp.le.s32.totalorder 2, %s16
      // Predicated region
      $region97: #{tpu_custom_call.1} parent=5 // pred_check
        %p1618 = pneg %p1617
      $region98: #{tpu_custom_call.1} parent=5 // pred_check_branch
        %1620 = sbr.rel (%p1618) target = $region100
      $region99: #{tpu_custom_call.1} parent=5 // pred_region
        %s1621 = ssub.s32 %s16, 2
        // Predicated region
        $region101: #{tpu_custom_call.1} parent=99 // pred_check
          %p1622 = pneg %p155
        $region102: #{tpu_custom_call.1} parent=99 // pred_check_branch
          %1624 = sbr.rel (%p1622) target = $region104
        $region103: #{tpu_custom_call.1} parent=99 // pred_region
          %s1625 = sand.u32 %s140, 1
          %s1626 = sand.u32 %s140, 1
          %s1627 = smul.addr %s1626, 160
          %s1628 = scalar_lea.vmem [#allocation5], %s1627
        $region104: #{tpu_custom_call.1} parent=99 // pred_fallthru
          _
      $region100: #{tpu_custom_call.1} parent=5 // pred_fallthru
        _
    $region6: #{tpu_custom_call.1} parent=1 // loop_footer
      %s20 = sadd.s32 1, %s16
    $region7: #{tpu_custom_call.1} parent=1 // loop_footer_branch
      %15 = sbr.rel target = $region3
    $region8: #{tpu_custom_call.1} parent=1 // loop_exit
      _
    %1629 = vsyncpa [#allocation4], 1
    %s1630 = scalar_lea.sflag [#allocation4], 1
    %1631 = vsyncpa %s1630, 1

</llo_original>
